<compile_context>
chip_gen: v7x
topology: tpu7x:2x2x1
jax: 0.10.0
libtpu: 0.0.40
codegen_flags: <defaults>
</compile_context>

<pallas_src>
import jax
import jax.numpy as jnp
import numpy as np
from jax.experimental import pallas as pl
from jax.experimental.pallas import tpu as pltpu


def related_kernel(
    x_ref,      # (T*B, W)     f32  time-major word embeddings, row t*B + b
    lens_ref,   # (B, 1)       i32  sequence lengths
    ff_ref,     # (B, 2F)      f32  [f1 | f2] feature embeddings
    wih_ref,    # (W, 6H)      f32  gate-interleaved input weights [r_f r_b|z_f z_b|n_f n_b]
    w2h_ref,    # (2H, 8H)     f32  [block-diag hidden weights (2H,6H) | Ws^T (2H,2H)]
    v_blk_ref,  # (T*2H, T)    f32  block-diag replication of v (all scores in one matmul)
    fc_w_ref,   # (2H+2F, C)   f32  fc weight (pre-transposed)
    b_ref,      # (5, P)       f32  packed biases
    prob_ref,   # (B, C)       f32  output logits
):
    B = lens_ref.shape[0]
    H6 = wih_ref.shape[1]
    H = H6 // 6
    H2 = 2 * H
    T = v_blk_ref.shape[1]
    C = fc_w_ref.shape[1]

    lens = lens_ref[...]                                   # (B, 1) int32

    # packed biases — single VMEM ref, static slices
    b_gi = b_ref[0:1, 0:H6]    # bih + bhh(r,z) (folded into the hoisted projection)
    b_hn = b_ref[1:2, 0:H2]    # bhh(n) — must stay inside the r*(...) term
    b_ws = b_ref[2:3, 0:H2]
    b_v  = b_ref[3:4, 0:1]
    b_fc = b_ref[4:5, 0:C]

    # ---- hoisted input projection: one MXU matmul for all steps & both directions ----
    gi_all = jnp.dot(x_ref[...], wih_ref[...],
                     preferred_element_type=jnp.float32) + b_gi          # (T*B, 6H)

    whh  = w2h_ref[:, 0:H6]         # (2H, 6H) block-diag, gate-interleaved
    ws_w = w2h_ref[:, H6:H6 + H2]   # (2H, 2H)

    # ---- hoisted selectors / masks (nothing re-broadcast inside the unrolled loop) ---
    fwd_cols = (jax.lax.broadcasted_iota(jnp.int32, (1, H6), 1) % H2) < H   # (1,6H)
    fwd_half = jax.lax.broadcasted_iota(jnp.int32, (1, H2), 1) < H          # (1,2H)
    step_i = jax.lax.broadcasted_iota(jnp.int32, (T, H2), 0)
    col_i  = jax.lax.broadcasted_iota(jnp.int32, (T, H2), 1)
    thr    = jnp.where(col_i >= H, T - 1 - step_i, step_i)                  # (T,2H)

    # ---- fused bidirectional GRU recurrence: full-width gates, fully unrolled --------
    h = jnp.zeros((B, H2), jnp.float32)          # carry = [h_fwd | h_bwd]
    outs = []                                    # outs[i] = masked [fwd(i) | bwd(T-1-i)]
    for i in range(T):
        j = T - 1 - i
        # fwd gate columns come from time i, bwd from time j — one lane-aligned select
        gi = jnp.where(fwd_cols,
                       gi_all[i * B:(i + 1) * B, :],
                       gi_all[j * B:(j + 1) * B, :])                        # (B, 6H)
        gh = jnp.dot(h, whh, preferred_element_type=jnp.float32)            # (B, 6H)

        # PyTorch GRU gate order [r, z, n], both directions computed side by side
        r = jax.nn.sigmoid(gi[:, 0:H2] + gh[:, 0:H2])
        z = jax.nn.sigmoid(gi[:, H2:2 * H2] + gh[:, H2:2 * H2])
        n = jnp.tanh(gi[:, 2 * H2:3 * H2] + r * (gh[:, 2 * H2:3 * H2] + b_hn))
        h_new = (1.0 - z) * n + z * h                                       # (B, 2H)

        m = lens > thr[i:i + 1, :]        # (B,2H): fwd half valid if t=i, bwd if t=j
        h = jnp.where(m, h_new, h)        # carry holds past each sequence's end
        outs.append(jnp.where(m, h_new, jnp.zeros_like(h_new)))   # padded outputs -> 0

    # Bidirectional GRU output at time t: [fwd(t) | bwd(t)] via a lane-aligned select
    rows = [jnp.where(fwd_half, outs[t], outs[T - 1 - t]) for t in range(T)]

    # ---- attention + classifier -------------------------------------------------------
    dec_proj = jnp.dot(h, ws_w, preferred_element_type=jnp.float32) + b_ws   # (B, 2H)
    tmp_cat = jnp.concatenate([jnp.tanh(rows[t] + dec_proj) for t in range(T)],
                              axis=-1)                                       # (B, T*2H)
    # all T attention scores from one MXU matmul against block-diag(v)
    scores = jnp.dot(tmp_cat, v_blk_ref[...],
                     preferred_element_type=jnp.float32) + b_v               # (B, T)

    # softmax over time (matches PyTorch: no mask — padded rows contribute 0 to context)
    m_s = jnp.max(scores, axis=-1, keepdims=True)
    e = jnp.exp(scores - m_s)
    attn = e / jnp.sum(e, axis=-1, keepdims=True)     # exact divide for f32 parity

    context = attn[:, 0:1] * rows[0]
    for t in range(1, T):
        context = context + attn[:, t:t + 1] * rows[t]                      # (B, 2H)

    feat = jnp.concatenate([context, ff_ref[...]], axis=-1)                  # (B, 2H+2F)
    prob_ref[...] = jnp.dot(feat, fc_w_ref[...],
                            preferred_element_type=jnp.float32) + b_fc


def pack_params(params, T):
    """One-time parameter layout plumbing (hoisted out of the per-call forward path).

    Call once per model / max sequence length and reuse for every forward call.
    """
    f32 = jnp.float32
    H3 = params["wih_f"].shape[0]
    H = H3 // 3
    H2, H6 = 2 * H, 6 * H
    C = params["fc_w"].shape[0]

    def interleave_cols(a_f, a_b):
        # a_f, a_b: (X, 3H) with columns [r|z|n]  ->  (X, 6H) [r_f r_b | z_f z_b | n_f n_b]
        return jnp.concatenate([a_f[:, 0:H], a_b[:, 0:H],
                                a_f[:, H:2 * H], a_b[:, H:2 * H],
                                a_f[:, 2 * H:3 * H], a_b[:, 2 * H:3 * H]], axis=1)

    # gate-interleaved input weights
    wih = interleave_cols(params["wih_f"].T, params["wih_b"].T).astype(f32)       # (W, 6H)

    # block-diagonal hidden weights so [h_f | h_b] @ whh yields both directions at once
    zH = jnp.zeros((H, 3 * H), f32)
    whh = interleave_cols(
        jnp.concatenate([params["whh_f"].T.astype(f32), zH], axis=0),
        jnp.concatenate([zH, params["whh_b"].T.astype(f32)], axis=0))             # (2H, 6H)
    w2h = jnp.concatenate([whh, params["ws_w"].T.astype(f32)], axis=1)            # (2H, 8H)

    def interleave_vec(v_f, v_b):
        return jnp.concatenate([v_f[0:H], v_b[0:H], v_f[H:2 * H], v_b[H:2 * H],
                                v_f[2 * H:], v_b[2 * H:]])

    bih = interleave_vec(params["bih_f"], params["bih_b"]).astype(f32)
    bhh = interleave_vec(params["bhh_f"], params["bhh_b"]).astype(f32)
    # r/z hidden biases fold into the hoisted projection; n-gate hidden bias stays in-loop
    gi_bias = bih + jnp.concatenate([bhh[0:4 * H], jnp.zeros((H2,), f32)])
    b_hn = bhh[4 * H:6 * H]

    P = max(H6, H2, C, 1)

    def row(v):
        v = jnp.asarray(v, f32).reshape(-1)
        return jnp.pad(v, (0, P - v.shape[0])).reshape(1, P)

    biases = jnp.concatenate([row(gi_bias), row(b_hn), row(params["ws_b"]),
                              row(params["v_b"]), row(params["fc_b"])], axis=0)   # (5, P)

    # block-diag replication of v so all T attention scores come from one matmul
    # TODO(synk): for production T replace the O(2H*T^2) v_blk with per-time-block
    # (B,2H)x(2H,1) scores (or a lane reduce) to keep VMEM linear in T.
    v_col = params["v_w"].astype(f32).reshape(-1, 1)                              # (2H, 1)
    v_blk = jnp.kron(jnp.eye(T, dtype=f32), v_col)                                # (T*2H, T)

    return {
        "embed_word": params["embed_word"],
        "embed_f1": params["embed_f1"],
        "embed_f2": params["embed_f2"],
        "wih": wih, "w2h": w2h, "v_blk": v_blk,
        "fc_w": params["fc_w"].T.astype(f32),                                     # (2H+2F, C)
        "biases": biases,
        "T": T, "C": C,
    }


def related_forward(packed, batch_txts, batch_lens, batch_f1s, batch_f2s):
    # per-call plain-JAX glue: embedding gathers + time-major flatten of the batch
    sents = packed["embed_word"][batch_txts].astype(jnp.float32)                  # (B, T, W)
    ff = jnp.concatenate([packed["embed_f1"][batch_f1s],
                          packed["embed_f2"][batch_f2s]], axis=1).astype(jnp.float32)
    B, T, W = sents.shape
    assert T == packed["T"], "pack_params T must match the padded sequence length"
    try:
        # pad_packed_sequence semantics: padded length equals max(batch_lens)
        assert int(jnp.max(batch_lens)) == T, "related_forward assumes max(batch_lens) == T"
    except jax.errors.ConcretizationTypeError:
        pass  # under jit the lengths are traced; the check is skipped

    x2d = jnp.transpose(sents, (1, 0, 2)).reshape(T * B, W)          # row t*B + b
    lens = batch_lens.reshape(B, 1).astype(jnp.int32)

    inputs = (x2d, lens, ff, packed["wih"], packed["w2h"],
              packed["v_blk"], packed["fc_w"], packed["biases"])

    vmem = pl.BlockSpec(memory_space=pltpu.MemorySpace.VMEM)
    return pl.pallas_call(
        related_kernel,
        out_shape=jax.ShapeDtypeStruct((B, packed["C"]), jnp.float32),
        in_specs=[vmem] * len(inputs),
        out_specs=vmem,
    )(*inputs)


def related_reference(params, batch_txts, batch_lens, batch_f1s, batch_f2s):
    """Pure-JAX reference mirroring the PyTorch module (correctness self-check only)."""
    sents = params["embed_word"][batch_txts].astype(jnp.float32)     # (B, T, W)
    f1s = params["embed_f1"][batch_f1s].astype(jnp.float32)
    f2s = params["embed_f2"][batch_f2s].astype(jnp.float32)
    B, T, _ = sents.shape
    H = params["whh_f"].shape[1]
    lens = np.asarray(batch_lens)

    def cell(x, h, wih, whh, bih, bhh):
        gi = wih @ x + bih
        gh = whh @ h + bhh
        r = jax.nn.sigmoid(gi[0:H] + gh[0:H])
        z = jax.nn.sigmoid(gi[H:2 * H] + gh[H:2 * H])
        n = jnp.tanh(gi[2 * H:] + r * gh[2 * H:])
        return (1.0 - z) * n + z * h

    outputs, h_fs, h_bs = [], [], []
    for b in range(B):
        L = int(lens[b])
        of = [jnp.zeros((H,), jnp.float32)] * T
        ob = [jnp.zeros((H,), jnp.float32)] * T
        h = jnp.zeros((H,), jnp.float32)
        for t in range(L):
            h = cell(sents[b, t], h, params["wih_f"], params["whh_f"],
                     params["bih_f"], params["bhh_f"])
            of[t] = h
        h_fs.append(h)
        h = jnp.zeros((H,), jnp.float32)
        for t in range(L - 1, -1, -1):
            h = cell(sents[b, t], h, params["wih_b"], params["whh_b"],
                     params["bih_b"], params["bhh_b"])
            ob[t] = h
        h_bs.append(h)
        outputs.append(jnp.concatenate([jnp.stack(of), jnp.stack(ob)], axis=-1))
    output = jnp.stack(outputs)                                           # (B, T, 2H)
    hidden = jnp.concatenate([jnp.stack(h_fs), jnp.stack(h_bs)], axis=-1)  # (B, 2H)

    dec_proj = hidden @ params["ws_w"].T + params["ws_b"]
    tmp = jnp.tanh(output + dec_proj[:, None, :])
    scores = jnp.einsum("btd,d->bt", tmp, params["v_w"][0]) + params["v_b"][0]
    attn = jax.nn.softmax(scores, axis=1)
    context = jnp.einsum("bt,btd->bd", attn, output)
    feat = jnp.concatenate([context, f1s, f2s], axis=1)
    return feat @ params["fc_w"].T + params["fc_b"]


def init_params(key, vocab, n_f1, n_f2, w_dim, f_dim, h_dim, num_class):
    H = h_dim // 2
    ks = jax.random.split(key, 17)
    s = 0.1
    return {
        "embed_word": s * jax.random.normal(ks[0], (vocab, w_dim), jnp.float32),
        "embed_f1":   s * jax.random.normal(ks[1], (n_f1, f_dim), jnp.float32),
        "embed_f2":   s * jax.random.normal(ks[2], (n_f2, f_dim), jnp.float32),
        # bidirectional GRU, PyTorch layout (gate order r, z, n)
        "wih_f": s * jax.random.normal(ks[3], (3 * H, w_dim), jnp.float32),
        "whh_f": s * jax.random.normal(ks[4], (3 * H, H), jnp.float32),
        "bih_f": s * jax.random.normal(ks[5], (3 * H,), jnp.float32),
        "bhh_f": s * jax.random.normal(ks[6], (3 * H,), jnp.float32),
        "wih_b": s * jax.random.normal(ks[7], (3 * H, w_dim), jnp.float32),
        "whh_b": s * jax.random.normal(ks[8], (3 * H, H), jnp.float32),
        "bih_b": s * jax.random.normal(ks[9], (3 * H,), jnp.float32),
        "bhh_b": s * jax.random.normal(ks[10], (3 * H,), jnp.float32),
        # Ws: Linear(h_dim, h_dim)
        "ws_w": s * jax.random.normal(ks[11], (h_dim, h_dim), jnp.float32),
        "ws_b": s * jax.random.normal(ks[12], (h_dim,), jnp.float32),
        # v: Linear(h_dim, 1)
        "v_w": s * jax.random.normal(ks[13], (1, h_dim), jnp.float32),
        "v_b": s * jax.random.normal(ks[14], (1,), jnp.float32),
        # fc: Linear(h_dim + 2*f_dim, num_class)
        "fc_w": s * jax.random.normal(ks[15], (num_class, h_dim + 2 * f_dim), jnp.float32),
        "fc_b": s * jax.random.normal(ks[16], (num_class,), jnp.float32),
    }


if __name__ == "__main__":
    B, T = 2, 8
    w_dim, f_dim, h_dim, num_class = 32, 8, 32, 4
    vocab, n_f1, n_f2 = 50, 10, 10

    key = jax.random.PRNGKey(0)
    k_param, k_txt, k_f1, k_f2 = jax.random.split(key, 4)

    params = init_params(k_param, vocab, n_f1, n_f2, w_dim, f_dim, h_dim, num_class)
    packed = pack_params(params, T)          # one-time layout plumbing (cache & reuse)

    batch_txts = jax.random.randint(k_txt, (B, T), 0, vocab)
    # lengths sorted descending (pack_padded_sequence enforce_sorted=True), max == T
    batch_lens = jnp.array([T, T - 2], dtype=jnp.int32)
    batch_f1s = jax.random.randint(k_f1, (B,), 0, n_f1)
    batch_f2s = jax.random.randint(k_f2, (B,), 0, n_f2)

    prob = related_forward(packed, batch_txts, batch_lens, batch_f1s, batch_f2s)
    jax.block_until_ready(prob)
    assert prob.shape == (B, num_class)

    # correctness self-check against a pure-JAX reference of the PyTorch module
    with jax.default_matmul_precision("highest"):
        ref = related_reference(params, batch_txts, batch_lens, batch_f1s, batch_f2s)
    err = float(jnp.max(jnp.abs(prob - ref)))
    assert err < 2e-2, f"kernel/reference mismatch: max abs err = {err}"

    print("KERNEL_OK")
</pallas_src>

<mosaic_0001>
module attributes {stable_mosaic.version = 11 : i64} {
  func.func @related_kernel(%arg0: memref<16x32xf32, #tpu.memory_space<vmem>>, %arg1: memref<2x1xi32, #tpu.memory_space<vmem>>, %arg2: memref<2x16xf32, #tpu.memory_space<vmem>>, %arg3: memref<32x96xf32, #tpu.memory_space<vmem>>, %arg4: memref<32x128xf32, #tpu.memory_space<vmem>>, %arg5: memref<256x8xf32, #tpu.memory_space<vmem>>, %arg6: memref<48x4xf32, #tpu.memory_space<vmem>>, %arg7: memref<5x96xf32, #tpu.memory_space<vmem>>, %arg8: memref<2x4xf32, #tpu.memory_space<vmem>>) attributes {dimension_semantics = [], scalar_prefetch = 0 : i64, scratch_operands = 0 : i64, tpu.core_type = #tpu.core_type<tc>} {
    %c0 = arith.constant 0 : index
    %c0_0 = arith.constant 0 : index
    %0 = vector.load %arg1[%c0, %c0_0] : memref<2x1xi32, #tpu.memory_space<vmem>>, vector<2x1xi32>
    %c0_1 = arith.constant 0 : index
    %c0_2 = arith.constant 0 : index
    %1 = vector.load %arg7[%c0_1, %c0_2] : memref<5x96xf32, #tpu.memory_space<vmem>>, vector<1x96xf32>
    %c1 = arith.constant 1 : index
    %c0_3 = arith.constant 0 : index
    %2 = vector.load %arg7[%c1, %c0_3] : memref<5x96xf32, #tpu.memory_space<vmem>>, vector<1x32xf32>
    %c2 = arith.constant 2 : index
    %c0_4 = arith.constant 0 : index
    %3 = vector.load %arg7[%c2, %c0_4] : memref<5x96xf32, #tpu.memory_space<vmem>>, vector<1x32xf32>
    %c3 = arith.constant 3 : index
    %c0_5 = arith.constant 0 : index
    %4 = vector.load %arg7[%c3, %c0_5] : memref<5x96xf32, #tpu.memory_space<vmem>>, vector<1x1xf32>
    %c4 = arith.constant 4 : index
    %c0_6 = arith.constant 0 : index
    %5 = vector.load %arg7[%c4, %c0_6] : memref<5x96xf32, #tpu.memory_space<vmem>>, vector<1x4xf32>
    %c0_7 = arith.constant 0 : index
    %c0_8 = arith.constant 0 : index
    %6 = vector.load %arg0[%c0_7, %c0_8] : memref<16x32xf32, #tpu.memory_space<vmem>>, vector<16x32xf32>
    %c0_9 = arith.constant 0 : index
    %c0_10 = arith.constant 0 : index
    %7 = vector.load %arg3[%c0_9, %c0_10] : memref<32x96xf32, #tpu.memory_space<vmem>>, vector<32x96xf32>
    %cst = arith.constant dense<0.000000e+00> : vector<16x96xf32>
    %8 = tpu.matmul %6, %7, %cst {dimension_numbers = #tpu.dot_dimension_numbers<[1], [0], [0], [1], [0, 0, 1, 1], [], []>} : vector<16x32xf32>, vector<32x96xf32>, vector<16x96xf32> -> vector<16x96xf32>
    %9 = vector.broadcast %1 : vector<1x96xf32> to vector<16x96xf32>
    %10 = arith.addf %8, %9 : vector<16x96xf32>
    %c0_11 = arith.constant 0 : index
    %c0_12 = arith.constant 0 : index
    %11 = vector.load %arg4[%c0_11, %c0_12] : memref<32x128xf32, #tpu.memory_space<vmem>>, vector<32x96xf32>
    %c0_13 = arith.constant 0 : index
    %c96 = arith.constant 96 : index
    %12 = vector.load %arg4[%c0_13, %c96] : memref<32x128xf32, #tpu.memory_space<vmem>>, vector<32x32xf32>
    %13 = tpu.iota {dimensions = array<i32: 1>} : vector<1x96xi32>
    %c32_i32 = arith.constant 32 : i32
    %c0_i32 = arith.constant 0 : i32
    %14 = arith.cmpi eq, %c32_i32, %c0_i32 : i32
    %c1_i32 = arith.constant 1 : i32
    %15 = arith.select %14, %c1_i32, %c32_i32 : i32
    %16 = vector.broadcast %15 : i32 to vector<1x96xi32>
    %17 = arith.remsi %13, %16 : vector<1x96xi32>
    %c0_i32_14 = arith.constant 0 : i32
    %18 = vector.broadcast %c0_i32_14 : i32 to vector<1x96xi32>
    %19 = arith.cmpi ne, %17, %18 : vector<1x96xi32>
    %c0_i32_15 = arith.constant 0 : i32
    %20 = vector.broadcast %c0_i32_15 : i32 to vector<1x96xi32>
    %21 = arith.cmpi slt, %17, %20 : vector<1x96xi32>
    %c0_i32_16 = arith.constant 0 : i32
    %22 = arith.cmpi slt, %15, %c0_i32_16 : i32
    %23 = vector.broadcast %22 : i1 to vector<1x96xi1>
    %24 = vector.broadcast %23 : vector<1x96xi1> to vector<1x96xi1>
    %25 = arith.xori %21, %24 : vector<1x96xi1>
    %26 = arith.andi %25, %19 : vector<1x96xi1>
    %27 = vector.broadcast %15 : i32 to vector<1x96xi32>
    %28 = arith.addi %17, %27 : vector<1x96xi32>
    %29 = arith.select %26, %28, %17 : vector<1x96xi1>, vector<1x96xi32>
    %c16_i32 = arith.constant 16 : i32
    %30 = vector.broadcast %c16_i32 : i32 to vector<1x96xi32>
    %31 = arith.cmpi slt, %29, %30 : vector<1x96xi32>
    %32 = tpu.iota {dimensions = array<i32: 1>} : vector<1x32xi32>
    %c16_i32_17 = arith.constant 16 : i32
    %33 = vector.broadcast %c16_i32_17 : i32 to vector<1x32xi32>
    %34 = arith.cmpi slt, %32, %33 : vector<1x32xi32>
    %35 = tpu.iota {dimensions = array<i32: 0>} : vector<8x32xi32>
    %36 = tpu.iota {dimensions = array<i32: 1>} : vector<8x32xi32>
    %c16_i32_18 = arith.constant 16 : i32
    %37 = vector.broadcast %c16_i32_18 : i32 to vector<8x32xi32>
    %38 = arith.cmpi sge, %36, %37 : vector<8x32xi32>
    %c7_i32 = arith.constant 7 : i32
    %39 = vector.broadcast %c7_i32 : i32 to vector<8x32xi32>
    %40 = arith.subi %39, %35 : vector<8x32xi32>
    %41 = arith.select %38, %40, %35 : vector<8x32xi1>, vector<8x32xi32>
    %cst_19 = arith.constant 0.000000e+00 : f32
    %42 = vector.broadcast %cst_19 : f32 to vector<2x32xf32>
    %43 = vector.extract_strided_slice %10 {offsets = [0, 0], sizes = [2, 96], strides = [1, 1]} : vector<16x96xf32> to vector<2x96xf32>
    %44 = vector.extract_strided_slice %10 {offsets = [14, 0], sizes = [2, 96], strides = [1, 1]} : vector<16x96xf32> to vector<2x96xf32>
    %45 = vector.shape_cast %31 : vector<1x96xi1> to vector<1x96xi1>
    %46 = vector.broadcast %45 : vector<1x96xi1> to vector<2x96xi1>
    %47 = arith.select %46, %43, %44 : vector<2x96xi1>, vector<2x96xf32>
    %cst_20 = arith.constant dense<0.000000e+00> : vector<2x96xf32>
    %48 = tpu.matmul %42, %11, %cst_20 {dimension_numbers = #tpu.dot_dimension_numbers<[1], [0], [0], [1], [0, 0, 1, 1], [], []>} : vector<2x32xf32>, vector<32x96xf32>, vector<2x96xf32> -> vector<2x96xf32>
    %49 = vector.extract_strided_slice %47 {offsets = [0, 0], sizes = [2, 32], strides = [1, 1]} : vector<2x96xf32> to vector<2x32xf32>
    %50 = vector.extract_strided_slice %48 {offsets = [0, 0], sizes = [2, 32], strides = [1, 1]} : vector<2x96xf32> to vector<2x32xf32>
    %51 = arith.addf %49, %50 : vector<2x32xf32>
    %52 = arith.negf %51 : vector<2x32xf32>
    %53 = math.exp %52 : vector<2x32xf32>
    %cst_21 = arith.constant 1.000000e+00 : f32
    %54 = vector.broadcast %cst_21 : f32 to vector<2x32xf32>
    %55 = arith.addf %54, %53 : vector<2x32xf32>
    %56 = arith.divf %54, %55 : vector<2x32xf32>
    %57 = vector.extract_strided_slice %47 {offsets = [0, 32], sizes = [2, 32], strides = [1, 1]} : vector<2x96xf32> to vector<2x32xf32>
    %58 = vector.extract_strided_slice %48 {offsets = [0, 32], sizes = [2, 32], strides = [1, 1]} : vector<2x96xf32> to vector<2x32xf32>
    %59 = arith.addf %57, %58 : vector<2x32xf32>
    %60 = arith.negf %59 : vector<2x32xf32>
    %61 = math.exp %60 : vector<2x32xf32>
    %cst_22 = arith.constant 1.000000e+00 : f32
    %62 = vector.broadcast %cst_22 : f32 to vector<2x32xf32>
    %63 = arith.addf %62, %61 : vector<2x32xf32>
    %64 = arith.divf %62, %63 : vector<2x32xf32>
    %65 = vector.extract_strided_slice %47 {offsets = [0, 64], sizes = [2, 32], strides = [1, 1]} : vector<2x96xf32> to vector<2x32xf32>
    %66 = vector.extract_strided_slice %48 {offsets = [0, 64], sizes = [2, 32], strides = [1, 1]} : vector<2x96xf32> to vector<2x32xf32>
    %67 = vector.broadcast %2 : vector<1x32xf32> to vector<2x32xf32>
    %68 = arith.addf %66, %67 : vector<2x32xf32>
    %69 = arith.mulf %56, %68 : vector<2x32xf32>
    %70 = arith.addf %65, %69 : vector<2x32xf32>
    %71 = math.tanh %70 : vector<2x32xf32>
    %cst_23 = arith.constant 1.000000e+00 : f32
    %72 = vector.broadcast %cst_23 : f32 to vector<2x32xf32>
    %73 = arith.subf %72, %64 : vector<2x32xf32>
    %74 = arith.mulf %73, %71 : vector<2x32xf32>
    %75 = arith.mulf %64, %42 : vector<2x32xf32>
    %76 = arith.addf %74, %75 : vector<2x32xf32>
    %77 = vector.extract_strided_slice %41 {offsets = [0, 0], sizes = [1, 32], strides = [1, 1]} : vector<8x32xi32> to vector<1x32xi32>
    %78 = vector.broadcast %0 : vector<2x1xi32> to vector<2x32xi32>
    %79 = vector.broadcast %77 : vector<1x32xi32> to vector<2x32xi32>
    %80 = arith.cmpi sgt, %78, %79 : vector<2x32xi32>
    %81 = arith.select %80, %76, %42 : vector<2x32xi1>, vector<2x32xf32>
    %cst_24 = arith.constant 0.000000e+00 : f32
    %82 = vector.broadcast %cst_24 : f32 to vector<2x32xf32>
    %83 = arith.select %80, %76, %82 : vector<2x32xi1>, vector<2x32xf32>
    %84 = vector.extract_strided_slice %10 {offsets = [2, 0], sizes = [2, 96], strides = [1, 1]} : vector<16x96xf32> to vector<2x96xf32>
    %85 = vector.extract_strided_slice %10 {offsets = [12, 0], sizes = [2, 96], strides = [1, 1]} : vector<16x96xf32> to vector<2x96xf32>
    %86 = vector.shape_cast %31 : vector<1x96xi1> to vector<1x96xi1>
    %87 = vector.broadcast %86 : vector<1x96xi1> to vector<2x96xi1>
    %88 = arith.select %87, %84, %85 : vector<2x96xi1>, vector<2x96xf32>
    %cst_25 = arith.constant dense<0.000000e+00> : vector<2x96xf32>
    %89 = tpu.matmul %81, %11, %cst_25 {dimension_numbers = #tpu.dot_dimension_numbers<[1], [0], [0], [1], [0, 0, 1, 1], [], []>} : vector<2x32xf32>, vector<32x96xf32>, vector<2x96xf32> -> vector<2x96xf32>
    %90 = vector.extract_strided_slice %88 {offsets = [0, 0], sizes = [2, 32], strides = [1, 1]} : vector<2x96xf32> to vector<2x32xf32>
    %91 = vector.extract_strided_slice %89 {offsets = [0, 0], sizes = [2, 32], strides = [1, 1]} : vector<2x96xf32> to vector<2x32xf32>
    %92 = arith.addf %90, %91 : vector<2x32xf32>
    %93 = arith.negf %92 : vector<2x32xf32>
    %94 = math.exp %93 : vector<2x32xf32>
    %cst_26 = arith.constant 1.000000e+00 : f32
    %95 = vector.broadcast %cst_26 : f32 to vector<2x32xf32>
    %96 = arith.addf %95, %94 : vector<2x32xf32>
    %97 = arith.divf %95, %96 : vector<2x32xf32>
    %98 = vector.extract_strided_slice %88 {offsets = [0, 32], sizes = [2, 32], strides = [1, 1]} : vector<2x96xf32> to vector<2x32xf32>
    %99 = vector.extract_strided_slice %89 {offsets = [0, 32], sizes = [2, 32], strides = [1, 1]} : vector<2x96xf32> to vector<2x32xf32>
    %100 = arith.addf %98, %99 : vector<2x32xf32>
    %101 = arith.negf %100 : vector<2x32xf32>
    %102 = math.exp %101 : vector<2x32xf32>
    %cst_27 = arith.constant 1.000000e+00 : f32
    %103 = vector.broadcast %cst_27 : f32 to vector<2x32xf32>
    %104 = arith.addf %103, %102 : vector<2x32xf32>
    %105 = arith.divf %103, %104 : vector<2x32xf32>
    %106 = vector.extract_strided_slice %88 {offsets = [0, 64], sizes = [2, 32], strides = [1, 1]} : vector<2x96xf32> to vector<2x32xf32>
    %107 = vector.extract_strided_slice %89 {offsets = [0, 64], sizes = [2, 32], strides = [1, 1]} : vector<2x96xf32> to vector<2x32xf32>
    %108 = vector.broadcast %2 : vector<1x32xf32> to vector<2x32xf32>
    %109 = arith.addf %107, %108 : vector<2x32xf32>
    %110 = arith.mulf %97, %109 : vector<2x32xf32>
    %111 = arith.addf %106, %110 : vector<2x32xf32>
    %112 = math.tanh %111 : vector<2x32xf32>
    %cst_28 = arith.constant 1.000000e+00 : f32
    %113 = vector.broadcast %cst_28 : f32 to vector<2x32xf32>
    %114 = arith.subf %113, %105 : vector<2x32xf32>
    %115 = arith.mulf %114, %112 : vector<2x32xf32>
    %116 = arith.mulf %105, %81 : vector<2x32xf32>
    %117 = arith.addf %115, %116 : vector<2x32xf32>
    %118 = vector.extract_strided_slice %41 {offsets = [1, 0], sizes = [1, 32], strides = [1, 1]} : vector<8x32xi32> to vector<1x32xi32>
    %119 = vector.broadcast %0 : vector<2x1xi32> to vector<2x32xi32>
    %120 = vector.broadcast %118 : vector<1x32xi32> to vector<2x32xi32>
    %121 = arith.cmpi sgt, %119, %120 : vector<2x32xi32>
    %122 = arith.select %121, %117, %81 : vector<2x32xi1>, vector<2x32xf32>
    %cst_29 = arith.constant 0.000000e+00 : f32
    %123 = vector.broadcast %cst_29 : f32 to vector<2x32xf32>
    %124 = arith.select %121, %117, %123 : vector<2x32xi1>, vector<2x32xf32>
    %125 = vector.extract_strided_slice %10 {offsets = [4, 0], sizes = [2, 96], strides = [1, 1]} : vector<16x96xf32> to vector<2x96xf32>
    %126 = vector.extract_strided_slice %10 {offsets = [10, 0], sizes = [2, 96], strides = [1, 1]} : vector<16x96xf32> to vector<2x96xf32>
    %127 = vector.shape_cast %31 : vector<1x96xi1> to vector<1x96xi1>
    %128 = vector.broadcast %127 : vector<1x96xi1> to vector<2x96xi1>
    %129 = arith.select %128, %125, %126 : vector<2x96xi1>, vector<2x96xf32>
    %cst_30 = arith.constant dense<0.000000e+00> : vector<2x96xf32>
    %130 = tpu.matmul %122, %11, %cst_30 {dimension_numbers = #tpu.dot_dimension_numbers<[1], [0], [0], [1], [0, 0, 1, 1], [], []>} : vector<2x32xf32>, vector<32x96xf32>, vector<2x96xf32> -> vector<2x96xf32>
    %131 = vector.extract_strided_slice %129 {offsets = [0, 0], sizes = [2, 32], strides = [1, 1]} : vector<2x96xf32> to vector<2x32xf32>
    %132 = vector.extract_strided_slice %130 {offsets = [0, 0], sizes = [2, 32], strides = [1, 1]} : vector<2x96xf32> to vector<2x32xf32>
    %133 = arith.addf %131, %132 : vector<2x32xf32>
    %134 = arith.negf %133 : vector<2x32xf32>
    %135 = math.exp %134 : vector<2x32xf32>
    %cst_31 = arith.constant 1.000000e+00 : f32
    %136 = vector.broadcast %cst_31 : f32 to vector<2x32xf32>
    %137 = arith.addf %136, %135 : vector<2x32xf32>
    %138 = arith.divf %136, %137 : vector<2x32xf32>
    %139 = vector.extract_strided_slice %129 {offsets = [0, 32], sizes = [2, 32], strides = [1, 1]} : vector<2x96xf32> to vector<2x32xf32>
    %140 = vector.extract_strided_slice %130 {offsets = [0, 32], sizes = [2, 32], strides = [1, 1]} : vector<2x96xf32> to vector<2x32xf32>
    %141 = arith.addf %139, %140 : vector<2x32xf32>
    %142 = arith.negf %141 : vector<2x32xf32>
    %143 = math.exp %142 : vector<2x32xf32>
    %cst_32 = arith.constant 1.000000e+00 : f32
    %144 = vector.broadcast %cst_32 : f32 to vector<2x32xf32>
    %145 = arith.addf %144, %143 : vector<2x32xf32>
    %146 = arith.divf %144, %145 : vector<2x32xf32>
    %147 = vector.extract_strided_slice %129 {offsets = [0, 64], sizes = [2, 32], strides = [1, 1]} : vector<2x96xf32> to vector<2x32xf32>
    %148 = vector.extract_strided_slice %130 {offsets = [0, 64], sizes = [2, 32], strides = [1, 1]} : vector<2x96xf32> to vector<2x32xf32>
    %149 = vector.broadcast %2 : vector<1x32xf32> to vector<2x32xf32>
    %150 = arith.addf %148, %149 : vector<2x32xf32>
    %151 = arith.mulf %138, %150 : vector<2x32xf32>
    %152 = arith.addf %147, %151 : vector<2x32xf32>
    %153 = math.tanh %152 : vector<2x32xf32>
    %cst_33 = arith.constant 1.000000e+00 : f32
    %154 = vector.broadcast %cst_33 : f32 to vector<2x32xf32>
    %155 = arith.subf %154, %146 : vector<2x32xf32>
    %156 = arith.mulf %155, %153 : vector<2x32xf32>
    %157 = arith.mulf %146, %122 : vector<2x32xf32>
    %158 = arith.addf %156, %157 : vector<2x32xf32>
    %159 = vector.extract_strided_slice %41 {offsets = [2, 0], sizes = [1, 32], strides = [1, 1]} : vector<8x32xi32> to vector<1x32xi32>
    %160 = vector.broadcast %0 : vector<2x1xi32> to vector<2x32xi32>
    %161 = vector.broadcast %159 : vector<1x32xi32> to vector<2x32xi32>
    %162 = arith.cmpi sgt, %160, %161 : vector<2x32xi32>
    %163 = arith.select %162, %158, %122 : vector<2x32xi1>, vector<2x32xf32>
    %cst_34 = arith.constant 0.000000e+00 : f32
    %164 = vector.broadcast %cst_34 : f32 to vector<2x32xf32>
    %165 = arith.select %162, %158, %164 : vector<2x32xi1>, vector<2x32xf32>
    %166 = vector.extract_strided_slice %10 {offsets = [6, 0], sizes = [2, 96], strides = [1, 1]} : vector<16x96xf32> to vector<2x96xf32>
    %167 = vector.extract_strided_slice %10 {offsets = [8, 0], sizes = [2, 96], strides = [1, 1]} : vector<16x96xf32> to vector<2x96xf32>
    %168 = vector.shape_cast %31 : vector<1x96xi1> to vector<1x96xi1>
    %169 = vector.broadcast %168 : vector<1x96xi1> to vector<2x96xi1>
    %170 = arith.select %169, %166, %167 : vector<2x96xi1>, vector<2x96xf32>
    %cst_35 = arith.constant dense<0.000000e+00> : vector<2x96xf32>
    %171 = tpu.matmul %163, %11, %cst_35 {dimension_numbers = #tpu.dot_dimension_numbers<[1], [0], [0], [1], [0, 0, 1, 1], [], []>} : vector<2x32xf32>, vector<32x96xf32>, vector<2x96xf32> -> vector<2x96xf32>
    %172 = vector.extract_strided_slice %170 {offsets = [0, 0], sizes = [2, 32], strides = [1, 1]} : vector<2x96xf32> to vector<2x32xf32>
    %173 = vector.extract_strided_slice %171 {offsets = [0, 0], sizes = [2, 32], strides = [1, 1]} : vector<2x96xf32> to vector<2x32xf32>
    %174 = arith.addf %172, %173 : vector<2x32xf32>
    %175 = arith.negf %174 : vector<2x32xf32>
    %176 = math.exp %175 : vector<2x32xf32>
    %cst_36 = arith.constant 1.000000e+00 : f32
    %177 = vector.broadcast %cst_36 : f32 to vector<2x32xf32>
    %178 = arith.addf %177, %176 : vector<2x32xf32>
    %179 = arith.divf %177, %178 : vector<2x32xf32>
    %180 = vector.extract_strided_slice %170 {offsets = [0, 32], sizes = [2, 32], strides = [1, 1]} : vector<2x96xf32> to vector<2x32xf32>
    %181 = vector.extract_strided_slice %171 {offsets = [0, 32], sizes = [2, 32], strides = [1, 1]} : vector<2x96xf32> to vector<2x32xf32>
    %182 = arith.addf %180, %181 : vector<2x32xf32>
    %183 = arith.negf %182 : vector<2x32xf32>
    %184 = math.exp %183 : vector<2x32xf32>
    %cst_37 = arith.constant 1.000000e+00 : f32
    %185 = vector.broadcast %cst_37 : f32 to vector<2x32xf32>
    %186 = arith.addf %185, %184 : vector<2x32xf32>
    %187 = arith.divf %185, %186 : vector<2x32xf32>
    %188 = vector.extract_strided_slice %170 {offsets = [0, 64], sizes = [2, 32], strides = [1, 1]} : vector<2x96xf32> to vector<2x32xf32>
    %189 = vector.extract_strided_slice %171 {offsets = [0, 64], sizes = [2, 32], strides = [1, 1]} : vector<2x96xf32> to vector<2x32xf32>
    %190 = vector.broadcast %2 : vector<1x32xf32> to vector<2x32xf32>
    %191 = arith.addf %189, %190 : vector<2x32xf32>
    %192 = arith.mulf %179, %191 : vector<2x32xf32>
    %193 = arith.addf %188, %192 : vector<2x32xf32>
    %194 = math.tanh %193 : vector<2x32xf32>
    %cst_38 = arith.constant 1.000000e+00 : f32
    %195 = vector.broadcast %cst_38 : f32 to vector<2x32xf32>
    %196 = arith.subf %195, %187 : vector<2x32xf32>
    %197 = arith.mulf %196, %194 : vector<2x32xf32>
    %198 = arith.mulf %187, %163 : vector<2x32xf32>
    %199 = arith.addf %197, %198 : vector<2x32xf32>
    %200 = vector.extract_strided_slice %41 {offsets = [3, 0], sizes = [1, 32], strides = [1, 1]} : vector<8x32xi32> to vector<1x32xi32>
    %201 = vector.broadcast %0 : vector<2x1xi32> to vector<2x32xi32>
    %202 = vector.broadcast %200 : vector<1x32xi32> to vector<2x32xi32>
    %203 = arith.cmpi sgt, %201, %202 : vector<2x32xi32>
    %204 = arith.select %203, %199, %163 : vector<2x32xi1>, vector<2x32xf32>
    %cst_39 = arith.constant 0.000000e+00 : f32
    %205 = vector.broadcast %cst_39 : f32 to vector<2x32xf32>
    %206 = arith.select %203, %199, %205 : vector<2x32xi1>, vector<2x32xf32>
    %207 = vector.extract_strided_slice %10 {offsets = [8, 0], sizes = [2, 96], strides = [1, 1]} : vector<16x96xf32> to vector<2x96xf32>
    %208 = vector.extract_strided_slice %10 {offsets = [6, 0], sizes = [2, 96], strides = [1, 1]} : vector<16x96xf32> to vector<2x96xf32>
    %209 = vector.shape_cast %31 : vector<1x96xi1> to vector<1x96xi1>
    %210 = vector.broadcast %209 : vector<1x96xi1> to vector<2x96xi1>
    %211 = arith.select %210, %207, %208 : vector<2x96xi1>, vector<2x96xf32>
    %cst_40 = arith.constant dense<0.000000e+00> : vector<2x96xf32>
    %212 = tpu.matmul %204, %11, %cst_40 {dimension_numbers = #tpu.dot_dimension_numbers<[1], [0], [0], [1], [0, 0, 1, 1], [], []>} : vector<2x32xf32>, vector<32x96xf32>, vector<2x96xf32> -> vector<2x96xf32>
    %213 = vector.extract_strided_slice %211 {offsets = [0, 0], sizes = [2, 32], strides = [1, 1]} : vector<2x96xf32> to vector<2x32xf32>
    %214 = vector.extract_strided_slice %212 {offsets = [0, 0], sizes = [2, 32], strides = [1, 1]} : vector<2x96xf32> to vector<2x32xf32>
    %215 = arith.addf %213, %214 : vector<2x32xf32>
    %216 = arith.negf %215 : vector<2x32xf32>
    %217 = math.exp %216 : vector<2x32xf32>
    %cst_41 = arith.constant 1.000000e+00 : f32
    %218 = vector.broadcast %cst_41 : f32 to vector<2x32xf32>
    %219 = arith.addf %218, %217 : vector<2x32xf32>
    %220 = arith.divf %218, %219 : vector<2x32xf32>
    %221 = vector.extract_strided_slice %211 {offsets = [0, 32], sizes = [2, 32], strides = [1, 1]} : vector<2x96xf32> to vector<2x32xf32>
    %222 = vector.extract_strided_slice %212 {offsets = [0, 32], sizes = [2, 32], strides = [1, 1]} : vector<2x96xf32> to vector<2x32xf32>
    %223 = arith.addf %221, %222 : vector<2x32xf32>
    %224 = arith.negf %223 : vector<2x32xf32>
    %225 = math.exp %224 : vector<2x32xf32>
    %cst_42 = arith.constant 1.000000e+00 : f32
    %226 = vector.broadcast %cst_42 : f32 to vector<2x32xf32>
    %227 = arith.addf %226, %225 : vector<2x32xf32>
    %228 = arith.divf %226, %227 : vector<2x32xf32>
    %229 = vector.extract_strided_slice %211 {offsets = [0, 64], sizes = [2, 32], strides = [1, 1]} : vector<2x96xf32> to vector<2x32xf32>
    %230 = vector.extract_strided_slice %212 {offsets = [0, 64], sizes = [2, 32], strides = [1, 1]} : vector<2x96xf32> to vector<2x32xf32>
    %231 = vector.broadcast %2 : vector<1x32xf32> to vector<2x32xf32>
    %232 = arith.addf %230, %231 : vector<2x32xf32>
    %233 = arith.mulf %220, %232 : vector<2x32xf32>
    %234 = arith.addf %229, %233 : vector<2x32xf32>
    %235 = math.tanh %234 : vector<2x32xf32>
    %cst_43 = arith.constant 1.000000e+00 : f32
    %236 = vector.broadcast %cst_43 : f32 to vector<2x32xf32>
    %237 = arith.subf %236, %228 : vector<2x32xf32>
    %238 = arith.mulf %237, %235 : vector<2x32xf32>
    %239 = arith.mulf %228, %204 : vector<2x32xf32>
    %240 = arith.addf %238, %239 : vector<2x32xf32>
    %241 = vector.extract_strided_slice %41 {offsets = [4, 0], sizes = [1, 32], strides = [1, 1]} : vector<8x32xi32> to vector<1x32xi32>
    %242 = vector.broadcast %0 : vector<2x1xi32> to vector<2x32xi32>
    %243 = vector.broadcast %241 : vector<1x32xi32> to vector<2x32xi32>
    %244 = arith.cmpi sgt, %242, %243 : vector<2x32xi32>
    %245 = arith.select %244, %240, %204 : vector<2x32xi1>, vector<2x32xf32>
    %cst_44 = arith.constant 0.000000e+00 : f32
    %246 = vector.broadcast %cst_44 : f32 to vector<2x32xf32>
    %247 = arith.select %244, %240, %246 : vector<2x32xi1>, vector<2x32xf32>
    %248 = vector.extract_strided_slice %10 {offsets = [10, 0], sizes = [2, 96], strides = [1, 1]} : vector<16x96xf32> to vector<2x96xf32>
    %249 = vector.extract_strided_slice %10 {offsets = [4, 0], sizes = [2, 96], strides = [1, 1]} : vector<16x96xf32> to vector<2x96xf32>
    %250 = vector.shape_cast %31 : vector<1x96xi1> to vector<1x96xi1>
    %251 = vector.broadcast %250 : vector<1x96xi1> to vector<2x96xi1>
    %252 = arith.select %251, %248, %249 : vector<2x96xi1>, vector<2x96xf32>
    %cst_45 = arith.constant dense<0.000000e+00> : vector<2x96xf32>
    %253 = tpu.matmul %245, %11, %cst_45 {dimension_numbers = #tpu.dot_dimension_numbers<[1], [0], [0], [1], [0, 0, 1, 1], [], []>} : vector<2x32xf32>, vector<32x96xf32>, vector<2x96xf32> -> vector<2x96xf32>
    %254 = vector.extract_strided_slice %252 {offsets = [0, 0], sizes = [2, 32], strides = [1, 1]} : vector<2x96xf32> to vector<2x32xf32>
    %255 = vector.extract_strided_slice %253 {offsets = [0, 0], sizes = [2, 32], strides = [1, 1]} : vector<2x96xf32> to vector<2x32xf32>
    %256 = arith.addf %254, %255 : vector<2x32xf32>
    %257 = arith.negf %256 : vector<2x32xf32>
    %258 = math.exp %257 : vector<2x32xf32>
    %cst_46 = arith.constant 1.000000e+00 : f32
    %259 = vector.broadcast %cst_46 : f32 to vector<2x32xf32>
    %260 = arith.addf %259, %258 : vector<2x32xf32>
    %261 = arith.divf %259, %260 : vector<2x32xf32>
    %262 = vector.extract_strided_slice %252 {offsets = [0, 32], sizes = [2, 32], strides = [1, 1]} : vector<2x96xf32> to vector<2x32xf32>
    %263 = vector.extract_strided_slice %253 {offsets = [0, 32], sizes = [2, 32], strides = [1, 1]} : vector<2x96xf32> to vector<2x32xf32>
    %264 = arith.addf %262, %263 : vector<2x32xf32>
    %265 = arith.negf %264 : vector<2x32xf32>
    %266 = math.exp %265 : vector<2x32xf32>
    %cst_47 = arith.constant 1.000000e+00 : f32
    %267 = vector.broadcast %cst_47 : f32 to vector<2x32xf32>
    %268 = arith.addf %267, %266 : vector<2x32xf32>
    %269 = arith.divf %267, %268 : vector<2x32xf32>
    %270 = vector.extract_strided_slice %252 {offsets = [0, 64], sizes = [2, 32], strides = [1, 1]} : vector<2x96xf32> to vector<2x32xf32>
    %271 = vector.extract_strided_slice %253 {offsets = [0, 64], sizes = [2, 32], strides = [1, 1]} : vector<2x96xf32> to vector<2x32xf32>
    %272 = vector.broadcast %2 : vector<1x32xf32> to vector<2x32xf32>
    %273 = arith.addf %271, %272 : vector<2x32xf32>
    %274 = arith.mulf %261, %273 : vector<2x32xf32>
    %275 = arith.addf %270, %274 : vector<2x32xf32>
    %276 = math.tanh %275 : vector<2x32xf32>
    %cst_48 = arith.constant 1.000000e+00 : f32
    %277 = vector.broadcast %cst_48 : f32 to vector<2x32xf32>
    %278 = arith.subf %277, %269 : vector<2x32xf32>
    %279 = arith.mulf %278, %276 : vector<2x32xf32>
    %280 = arith.mulf %269, %245 : vector<2x32xf32>
    %281 = arith.addf %279, %280 : vector<2x32xf32>
    %282 = vector.extract_strided_slice %41 {offsets = [5, 0], sizes = [1, 32], strides = [1, 1]} : vector<8x32xi32> to vector<1x32xi32>
    %283 = vector.broadcast %0 : vector<2x1xi32> to vector<2x32xi32>
    %284 = vector.broadcast %282 : vector<1x32xi32> to vector<2x32xi32>
    %285 = arith.cmpi sgt, %283, %284 : vector<2x32xi32>
    %286 = arith.select %285, %281, %245 : vector<2x32xi1>, vector<2x32xf32>
    %cst_49 = arith.constant 0.000000e+00 : f32
    %287 = vector.broadcast %cst_49 : f32 to vector<2x32xf32>
    %288 = arith.select %285, %281, %287 : vector<2x32xi1>, vector<2x32xf32>
    %289 = vector.extract_strided_slice %10 {offsets = [12, 0], sizes = [2, 96], strides = [1, 1]} : vector<16x96xf32> to vector<2x96xf32>
    %290 = vector.extract_strided_slice %10 {offsets = [2, 0], sizes = [2, 96], strides = [1, 1]} : vector<16x96xf32> to vector<2x96xf32>
    %291 = vector.shape_cast %31 : vector<1x96xi1> to vector<1x96xi1>
    %292 = vector.broadcast %291 : vector<1x96xi1> to vector<2x96xi1>
    %293 = arith.select %292, %289, %290 : vector<2x96xi1>, vector<2x96xf32>
    %cst_50 = arith.constant dense<0.000000e+00> : vector<2x96xf32>
    %294 = tpu.matmul %286, %11, %cst_50 {dimension_numbers = #tpu.dot_dimension_numbers<[1], [0], [0], [1], [0, 0, 1, 1], [], []>} : vector<2x32xf32>, vector<32x96xf32>, vector<2x96xf32> -> vector<2x96xf32>
    %295 = vector.extract_strided_slice %293 {offsets = [0, 0], sizes = [2, 32], strides = [1, 1]} : vector<2x96xf32> to vector<2x32xf32>
    %296 = vector.extract_strided_slice %294 {offsets = [0, 0], sizes = [2, 32], strides = [1, 1]} : vector<2x96xf32> to vector<2x32xf32>
    %297 = arith.addf %295, %296 : vector<2x32xf32>
    %298 = arith.negf %297 : vector<2x32xf32>
    %299 = math.exp %298 : vector<2x32xf32>
    %cst_51 = arith.constant 1.000000e+00 : f32
    %300 = vector.broadcast %cst_51 : f32 to vector<2x32xf32>
    %301 = arith.addf %300, %299 : vector<2x32xf32>
    %302 = arith.divf %300, %301 : vector<2x32xf32>
    %303 = vector.extract_strided_slice %293 {offsets = [0, 32], sizes = [2, 32], strides = [1, 1]} : vector<2x96xf32> to vector<2x32xf32>
    %304 = vector.extract_strided_slice %294 {offsets = [0, 32], sizes = [2, 32], strides = [1, 1]} : vector<2x96xf32> to vector<2x32xf32>
    %305 = arith.addf %303, %304 : vector<2x32xf32>
    %306 = arith.negf %305 : vector<2x32xf32>
    %307 = math.exp %306 : vector<2x32xf32>
    %cst_52 = arith.constant 1.000000e+00 : f32
    %308 = vector.broadcast %cst_52 : f32 to vector<2x32xf32>
    %309 = arith.addf %308, %307 : vector<2x32xf32>
    %310 = arith.divf %308, %309 : vector<2x32xf32>
    %311 = vector.extract_strided_slice %293 {offsets = [0, 64], sizes = [2, 32], strides = [1, 1]} : vector<2x96xf32> to vector<2x32xf32>
    %312 = vector.extract_strided_slice %294 {offsets = [0, 64], sizes = [2, 32], strides = [1, 1]} : vector<2x96xf32> to vector<2x32xf32>
    %313 = vector.broadcast %2 : vector<1x32xf32> to vector<2x32xf32>
    %314 = arith.addf %312, %313 : vector<2x32xf32>
    %315 = arith.mulf %302, %314 : vector<2x32xf32>
    %316 = arith.addf %311, %315 : vector<2x32xf32>
    %317 = math.tanh %316 : vector<2x32xf32>
    %cst_53 = arith.constant 1.000000e+00 : f32
    %318 = vector.broadcast %cst_53 : f32 to vector<2x32xf32>
    %319 = arith.subf %318, %310 : vector<2x32xf32>
    %320 = arith.mulf %319, %317 : vector<2x32xf32>
    %321 = arith.mulf %310, %286 : vector<2x32xf32>
    %322 = arith.addf %320, %321 : vector<2x32xf32>
    %323 = vector.extract_strided_slice %41 {offsets = [6, 0], sizes = [1, 32], strides = [1, 1]} : vector<8x32xi32> to vector<1x32xi32>
    %324 = vector.broadcast %0 : vector<2x1xi32> to vector<2x32xi32>
    %325 = vector.broadcast %323 : vector<1x32xi32> to vector<2x32xi32>
    %326 = arith.cmpi sgt, %324, %325 : vector<2x32xi32>
    %327 = arith.select %326, %322, %286 : vector<2x32xi1>, vector<2x32xf32>
    %cst_54 = arith.constant 0.000000e+00 : f32
    %328 = vector.broadcast %cst_54 : f32 to vector<2x32xf32>
    %329 = arith.select %326, %322, %328 : vector<2x32xi1>, vector<2x32xf32>
    %330 = vector.extract_strided_slice %10 {offsets = [14, 0], sizes = [2, 96], strides = [1, 1]} : vector<16x96xf32> to vector<2x96xf32>
    %331 = vector.extract_strided_slice %10 {offsets = [0, 0], sizes = [2, 96], strides = [1, 1]} : vector<16x96xf32> to vector<2x96xf32>
    %332 = vector.shape_cast %31 : vector<1x96xi1> to vector<1x96xi1>
    %333 = vector.broadcast %332 : vector<1x96xi1> to vector<2x96xi1>
    %334 = arith.select %333, %330, %331 : vector<2x96xi1>, vector<2x96xf32>
    %cst_55 = arith.constant dense<0.000000e+00> : vector<2x96xf32>
    %335 = tpu.matmul %327, %11, %cst_55 {dimension_numbers = #tpu.dot_dimension_numbers<[1], [0], [0], [1], [0, 0, 1, 1], [], []>} : vector<2x32xf32>, vector<32x96xf32>, vector<2x96xf32> -> vector<2x96xf32>
    %336 = vector.extract_strided_slice %334 {offsets = [0, 0], sizes = [2, 32], strides = [1, 1]} : vector<2x96xf32> to vector<2x32xf32>
    %337 = vector.extract_strided_slice %335 {offsets = [0, 0], sizes = [2, 32], strides = [1, 1]} : vector<2x96xf32> to vector<2x32xf32>
    %338 = arith.addf %336, %337 : vector<2x32xf32>
    %339 = arith.negf %338 : vector<2x32xf32>
    %340 = math.exp %339 : vector<2x32xf32>
    %cst_56 = arith.constant 1.000000e+00 : f32
    %341 = vector.broadcast %cst_56 : f32 to vector<2x32xf32>
    %342 = arith.addf %341, %340 : vector<2x32xf32>
    %343 = arith.divf %341, %342 : vector<2x32xf32>
    %344 = vector.extract_strided_slice %334 {offsets = [0, 32], sizes = [2, 32], strides = [1, 1]} : vector<2x96xf32> to vector<2x32xf32>
    %345 = vector.extract_strided_slice %335 {offsets = [0, 32], sizes = [2, 32], strides = [1, 1]} : vector<2x96xf32> to vector<2x32xf32>
    %346 = arith.addf %344, %345 : vector<2x32xf32>
    %347 = arith.negf %346 : vector<2x32xf32>
    %348 = math.exp %347 : vector<2x32xf32>
    %cst_57 = arith.constant 1.000000e+00 : f32
    %349 = vector.broadcast %cst_57 : f32 to vector<2x32xf32>
    %350 = arith.addf %349, %348 : vector<2x32xf32>
    %351 = arith.divf %349, %350 : vector<2x32xf32>
    %352 = vector.extract_strided_slice %334 {offsets = [0, 64], sizes = [2, 32], strides = [1, 1]} : vector<2x96xf32> to vector<2x32xf32>
    %353 = vector.extract_strided_slice %335 {offsets = [0, 64], sizes = [2, 32], strides = [1, 1]} : vector<2x96xf32> to vector<2x32xf32>
    %354 = vector.broadcast %2 : vector<1x32xf32> to vector<2x32xf32>
    %355 = arith.addf %353, %354 : vector<2x32xf32>
    %356 = arith.mulf %343, %355 : vector<2x32xf32>
    %357 = arith.addf %352, %356 : vector<2x32xf32>
    %358 = math.tanh %357 : vector<2x32xf32>
    %cst_58 = arith.constant 1.000000e+00 : f32
    %359 = vector.broadcast %cst_58 : f32 to vector<2x32xf32>
    %360 = arith.subf %359, %351 : vector<2x32xf32>
    %361 = arith.mulf %360, %358 : vector<2x32xf32>
    %362 = arith.mulf %351, %327 : vector<2x32xf32>
    %363 = arith.addf %361, %362 : vector<2x32xf32>
    %364 = vector.extract_strided_slice %41 {offsets = [7, 0], sizes = [1, 32], strides = [1, 1]} : vector<8x32xi32> to vector<1x32xi32>
    %365 = vector.broadcast %0 : vector<2x1xi32> to vector<2x32xi32>
    %366 = vector.broadcast %364 : vector<1x32xi32> to vector<2x32xi32>
    %367 = arith.cmpi sgt, %365, %366 : vector<2x32xi32>
    %368 = arith.select %367, %363, %327 : vector<2x32xi1>, vector<2x32xf32>
    %cst_59 = arith.constant 0.000000e+00 : f32
    %369 = vector.broadcast %cst_59 : f32 to vector<2x32xf32>
    %370 = arith.select %367, %363, %369 : vector<2x32xi1>, vector<2x32xf32>
    %371 = vector.shape_cast %34 : vector<1x32xi1> to vector<1x32xi1>
    %372 = vector.broadcast %371 : vector<1x32xi1> to vector<2x32xi1>
    %373 = arith.select %372, %83, %370 : vector<2x32xi1>, vector<2x32xf32>
    %374 = vector.shape_cast %34 : vector<1x32xi1> to vector<1x32xi1>
    %375 = vector.broadcast %374 : vector<1x32xi1> to vector<2x32xi1>
    %376 = arith.select %375, %124, %329 : vector<2x32xi1>, vector<2x32xf32>
    %377 = vector.shape_cast %34 : vector<1x32xi1> to vector<1x32xi1>
    %378 = vector.broadcast %377 : vector<1x32xi1> to vector<2x32xi1>
    %379 = arith.select %378, %165, %288 : vector<2x32xi1>, vector<2x32xf32>
    %380 = vector.shape_cast %34 : vector<1x32xi1> to vector<1x32xi1>
    %381 = vector.broadcast %380 : vector<1x32xi1> to vector<2x32xi1>
    %382 = arith.select %381, %206, %247 : vector<2x32xi1>, vector<2x32xf32>
    %383 = vector.shape_cast %34 : vector<1x32xi1> to vector<1x32xi1>
    %384 = vector.broadcast %383 : vector<1x32xi1> to vector<2x32xi1>
    %385 = arith.select %384, %247, %206 : vector<2x32xi1>, vector<2x32xf32>
    %386 = vector.shape_cast %34 : vector<1x32xi1> to vector<1x32xi1>
    %387 = vector.broadcast %386 : vector<1x32xi1> to vector<2x32xi1>
    %388 = arith.select %387, %288, %165 : vector<2x32xi1>, vector<2x32xf32>
    %389 = vector.shape_cast %34 : vector<1x32xi1> to vector<1x32xi1>
    %390 = vector.broadcast %389 : vector<1x32xi1> to vector<2x32xi1>
    %391 = arith.select %390, %329, %124 : vector<2x32xi1>, vector<2x32xf32>
    %392 = vector.shape_cast %34 : vector<1x32xi1> to vector<1x32xi1>
    %393 = vector.broadcast %392 : vector<1x32xi1> to vector<2x32xi1>
    %394 = arith.select %393, %370, %83 : vector<2x32xi1>, vector<2x32xf32>
    %cst_60 = arith.constant dense<0.000000e+00> : vector<2x32xf32>
    %395 = tpu.matmul %368, %12, %cst_60 {dimension_numbers = #tpu.dot_dimension_numbers<[1], [0], [0], [1], [0, 0, 1, 1], [], []>} : vector<2x32xf32>, vector<32x32xf32>, vector<2x32xf32> -> vector<2x32xf32>
    %396 = vector.broadcast %3 : vector<1x32xf32> to vector<2x32xf32>
    %397 = arith.addf %395, %396 : vector<2x32xf32>
    %398 = arith.addf %373, %397 : vector<2x32xf32>
    %399 = math.tanh %398 : vector<2x32xf32>
    %400 = arith.addf %376, %397 : vector<2x32xf32>
    %401 = math.tanh %400 : vector<2x32xf32>
    %402 = arith.addf %379, %397 : vector<2x32xf32>
    %403 = math.tanh %402 : vector<2x32xf32>
    %404 = arith.addf %382, %397 : vector<2x32xf32>
    %405 = math.tanh %404 : vector<2x32xf32>
    %406 = arith.addf %385, %397 : vector<2x32xf32>
    %407 = math.tanh %406 : vector<2x32xf32>
    %408 = arith.addf %388, %397 : vector<2x32xf32>
    %409 = math.tanh %408 : vector<2x32xf32>
    %410 = arith.addf %391, %397 : vector<2x32xf32>
    %411 = math.tanh %410 : vector<2x32xf32>
    %412 = arith.addf %394, %397 : vector<2x32xf32>
    %413 = math.tanh %412 : vector<2x32xf32>
    %414 = tpu.concatenate %399, %401, %403, %405, %407, %409, %411, %413 in 1 : vector<2x32xf32>, vector<2x32xf32>, vector<2x32xf32>, vector<2x32xf32>, vector<2x32xf32>, vector<2x32xf32>, vector<2x32xf32>, vector<2x32xf32> -> vector<2x256xf32>
    %c0_61 = arith.constant 0 : index
    %c0_62 = arith.constant 0 : index
    %415 = vector.load %arg5[%c0_61, %c0_62] : memref<256x8xf32, #tpu.memory_space<vmem>>, vector<256x8xf32>
    %cst_63 = arith.constant dense<0.000000e+00> : vector<2x8xf32>
    %416 = tpu.matmul %414, %415, %cst_63 {dimension_numbers = #tpu.dot_dimension_numbers<[1], [0], [0], [1], [0, 0, 1, 1], [], []>} : vector<2x256xf32>, vector<256x8xf32>, vector<2x8xf32> -> vector<2x8xf32>
    %417 = vector.broadcast %4 : vector<1x1xf32> to vector<2x8xf32>
    %418 = arith.addf %416, %417 : vector<2x8xf32>
    %cst_64 = arith.constant dense<0xFF800000> : vector<2xf32>
    %419 = vector.multi_reduction <maximumf>, %418, %cst_64 [1] : vector<2x8xf32> to vector<2xf32>
    %420 = vector.shape_cast %419 : vector<2xf32> to vector<2x1xf32>
    %421 = vector.broadcast %420 : vector<2x1xf32> to vector<2x8xf32>
    %422 = arith.subf %418, %421 : vector<2x8xf32>
    %423 = math.exp %422 : vector<2x8xf32>
    %cst_65 = arith.constant dense<0.000000e+00> : vector<2xf32>
    %424 = vector.multi_reduction <add>, %423, %cst_65 [1] : vector<2x8xf32> to vector<2xf32>
    %425 = vector.shape_cast %424 : vector<2xf32> to vector<2x1xf32>
    %426 = vector.broadcast %425 : vector<2x1xf32> to vector<2x8xf32>
    %427 = arith.divf %423, %426 : vector<2x8xf32>
    %428 = vector.extract_strided_slice %427 {offsets = [0, 0], sizes = [2, 1], strides = [1, 1]} : vector<2x8xf32> to vector<2x1xf32>
    %429 = vector.broadcast %428 : vector<2x1xf32> to vector<2x32xf32>
    %430 = arith.mulf %429, %373 : vector<2x32xf32>
    %431 = vector.extract_strided_slice %427 {offsets = [0, 1], sizes = [2, 1], strides = [1, 1]} : vector<2x8xf32> to vector<2x1xf32>
    %432 = vector.broadcast %431 : vector<2x1xf32> to vector<2x32xf32>
    %433 = arith.mulf %432, %376 : vector<2x32xf32>
    %434 = arith.addf %430, %433 : vector<2x32xf32>
    %435 = vector.extract_strided_slice %427 {offsets = [0, 2], sizes = [2, 1], strides = [1, 1]} : vector<2x8xf32> to vector<2x1xf32>
    %436 = vector.broadcast %435 : vector<2x1xf32> to vector<2x32xf32>
    %437 = arith.mulf %436, %379 : vector<2x32xf32>
    %438 = arith.addf %434, %437 : vector<2x32xf32>
    %439 = vector.extract_strided_slice %427 {offsets = [0, 3], sizes = [2, 1], strides = [1, 1]} : vector<2x8xf32> to vector<2x1xf32>
    %440 = vector.broadcast %439 : vector<2x1xf32> to vector<2x32xf32>
    %441 = arith.mulf %440, %382 : vector<2x32xf32>
    %442 = arith.addf %438, %441 : vector<2x32xf32>
    %443 = vector.extract_strided_slice %427 {offsets = [0, 4], sizes = [2, 1], strides = [1, 1]} : vector<2x8xf32> to vector<2x1xf32>
    %444 = vector.broadcast %443 : vector<2x1xf32> to vector<2x32xf32>
    %445 = arith.mulf %444, %385 : vector<2x32xf32>
    %446 = arith.addf %442, %445 : vector<2x32xf32>
    %447 = vector.extract_strided_slice %427 {offsets = [0, 5], sizes = [2, 1], strides = [1, 1]} : vector<2x8xf32> to vector<2x1xf32>
    %448 = vector.broadcast %447 : vector<2x1xf32> to vector<2x32xf32>
    %449 = arith.mulf %448, %388 : vector<2x32xf32>
    %450 = arith.addf %446, %449 : vector<2x32xf32>
    %451 = vector.extract_strided_slice %427 {offsets = [0, 6], sizes = [2, 1], strides = [1, 1]} : vector<2x8xf32> to vector<2x1xf32>
    %452 = vector.broadcast %451 : vector<2x1xf32> to vector<2x32xf32>
    %453 = arith.mulf %452, %391 : vector<2x32xf32>
    %454 = arith.addf %450, %453 : vector<2x32xf32>
    %455 = vector.extract_strided_slice %427 {offsets = [0, 7], sizes = [2, 1], strides = [1, 1]} : vector<2x8xf32> to vector<2x1xf32>
    %456 = vector.broadcast %455 : vector<2x1xf32> to vector<2x32xf32>
    %457 = arith.mulf %456, %394 : vector<2x32xf32>
    %458 = arith.addf %454, %457 : vector<2x32xf32>
    %c0_66 = arith.constant 0 : index
    %c0_67 = arith.constant 0 : index
    %459 = vector.load %arg2[%c0_66, %c0_67] : memref<2x16xf32, #tpu.memory_space<vmem>>, vector<2x16xf32>
    %460 = tpu.concatenate %458, %459 in 1 : vector<2x32xf32>, vector<2x16xf32> -> vector<2x48xf32>
    %c0_68 = arith.constant 0 : index
    %c0_69 = arith.constant 0 : index
    %461 = vector.load %arg6[%c0_68, %c0_69] : memref<48x4xf32, #tpu.memory_space<vmem>>, vector<48x4xf32>
    %cst_70 = arith.constant dense<0.000000e+00> : vector<2x4xf32>
    %462 = tpu.matmul %460, %461, %cst_70 {dimension_numbers = #tpu.dot_dimension_numbers<[1], [0], [0], [1], [0, 0, 1, 1], [], []>} : vector<2x48xf32>, vector<48x4xf32>, vector<2x4xf32> -> vector<2x4xf32>
    %463 = vector.broadcast %5 : vector<1x4xf32> to vector<2x4xf32>
    %464 = arith.addf %462, %463 : vector<2x4xf32>
    %c0_71 = arith.constant 0 : index
    %c0_72 = arith.constant 0 : index
    %465 = vector.load %arg8[%c0_71, %c0_72] : memref<2x4xf32, #tpu.memory_space<vmem>>, vector<2x4xf32>
    tpu.vector_store %arg8[%c0_71, %c0_72], %464 {strides = array<i32>} : memref<2x4xf32, #tpu.memory_space<vmem>>, vector<2x4xf32>,
    return
  }
}

</mosaic_0001>

<llo_original>
// kernel: tpu_custom_call.1
$region0: #{tpu_custom_call.1}
  #allocation0 [shape = 'u32[]', space=smem, size = 0x4, offset = 0x4, fixed_abs, tag = 'smem constant byte address 0x4 - core index']
  #allocation1 [shape = 'u32[144,128]{1,0:T(1,128)}', space=vmem, size = 0x12000, scoped, tag = 'internal scratch']
  %s0 = inlined_call_operand.vmem [shape: f32[16,32], index: 0, kind: input, shape index: {}]
  %s1 = inlined_call_operand.vmem [shape: s32[2,1], index: 1, kind: input, shape index: {}]
  %s2 = inlined_call_operand.vmem [shape: f32[2,16], index: 2, kind: input, shape index: {}]
  %s3 = inlined_call_operand.vmem [shape: f32[32,96], index: 3, kind: input, shape index: {}]
  %s4 = inlined_call_operand.vmem [shape: f32[32,128], index: 4, kind: input, shape index: {}]
  %s5 = inlined_call_operand.vmem [shape: f32[256,8], index: 5, kind: input, shape index: {}]
  %s6 = inlined_call_operand.vmem [shape: f32[48,4], index: 6, kind: input, shape index: {}]
  %s7 = inlined_call_operand.vmem [shape: f32[5,96], index: 7, kind: input, shape index: {}]
  %s8 = inlined_call_operand.hbm [shape: f32[2,4], index: 8, kind: output, shape index: {}]
  %s9 = sld [smem:[#allocation0]]
  $region42: #{tpu_custom_call.1} parent=0
    _
  %s11 = ssub.s32 1, %s9
  %s12 = scalar_select 0, %s11, %s9
  $region1: #{tpu_custom_call.1} parent=0
    #allocation2 [shape = 'u8[1024]{0}', space=vmem, size = 0x400, scoped, tag = 'output window, operand 0, single buffered']
    #allocation3 [shape = 's32[1]{0}', space=sflag, size = 0x4, scoped, tag = 'scoped memory for tpu_custom_call.1']
    %13 = vsyncpa [#allocation3], 0
    // Predicated region
    $region2: #{tpu_custom_call.1} parent=1 // pred_check
      _
    $region3: #{tpu_custom_call.1} parent=1 // pred_check_branch
      %15 = sbr.rel (0) target = $region5
    $region4: #{tpu_custom_call.1} parent=1 // pred_region
      _
    $region5: #{tpu_custom_call.1} parent=1 // pred_fallthru
      _
    // Predicated region
    $region6: #{tpu_custom_call.1} parent=1 // pred_check
      _
    $region7: #{tpu_custom_call.1} parent=1 // pred_check_branch
      %17 = sbr.rel (0) target = $region9
    $region8: #{tpu_custom_call.1} parent=1 // pred_region
      _
    $region9: #{tpu_custom_call.1} parent=1 // pred_fallthru
      _
    // Predicated region
    $region10: #{tpu_custom_call.1} parent=1 // pred_check
      _
    $region11: #{tpu_custom_call.1} parent=1 // pred_check_branch
      %19 = sbr.rel (0) target = $region13
    $region12: #{tpu_custom_call.1} parent=1 // pred_region
      _
    $region13: #{tpu_custom_call.1} parent=1 // pred_fallthru
      _
    // Predicated region
    $region14: #{tpu_custom_call.1} parent=1 // pred_check
      _
    $region15: #{tpu_custom_call.1} parent=1 // pred_check_branch
      %21 = sbr.rel (0) target = $region17
    $region16: #{tpu_custom_call.1} parent=1 // pred_region
      _
    $region17: #{tpu_custom_call.1} parent=1 // pred_fallthru
      _
    // Predicated region
    $region18: #{tpu_custom_call.1} parent=1 // pred_check
      _
    $region19: #{tpu_custom_call.1} parent=1 // pred_check_branch
      %23 = sbr.rel (0) target = $region21
    $region20: #{tpu_custom_call.1} parent=1 // pred_region
      _
    $region21: #{tpu_custom_call.1} parent=1 // pred_fallthru
      _
    // Predicated region
    $region22: #{tpu_custom_call.1} parent=1 // pred_check
      _
    $region23: #{tpu_custom_call.1} parent=1 // pred_check_branch
      %25 = sbr.rel (0) target = $region25
    $region24: #{tpu_custom_call.1} parent=1 // pred_region
      _
    $region25: #{tpu_custom_call.1} parent=1 // pred_fallthru
      _
    // Predicated region
    $region26: #{tpu_custom_call.1} parent=1 // pred_check
      _
    $region27: #{tpu_custom_call.1} parent=1 // pred_check_branch
      %27 = sbr.rel (0) target = $region29
    $region28: #{tpu_custom_call.1} parent=1 // pred_region
      _
    $region29: #{tpu_custom_call.1} parent=1 // pred_fallthru
      _
    // Predicated region
    $region30: #{tpu_custom_call.1} parent=1 // pred_check
      _
    $region31: #{tpu_custom_call.1} parent=1 // pred_check_branch
      %29 = sbr.rel (0) target = $region33
    $region32: #{tpu_custom_call.1} parent=1 // pred_region
      _
    $region33: #{tpu_custom_call.1} parent=1 // pred_fallthru
      _
    %v30 = vld [vmem:[%s1] sm:$0x3]
    %v31 = vld [vmem:[%s7] sm:$0x1]
    %v32 = vld [vmem:[%s7 + $0x1] sm:$0x1]
    %v33 = vld [vmem:[%s7 + $0x2] sm:$0x1]
    %v34 = vld [vmem:[%s7 + $0x3] sm:$0x1]
    %v35 = vld [vmem:[%s7 + $0x4] sm:$0x1]
    %v36 = vld [vmem:[%s0] sm:$0xff]
    %v37 = vld [vmem:[%s0 + $0x8] sm:$0xff]
    %v38 = vld [vmem:[%s3] sm:$0xff]
    %v39 = vld [vmem:[%s3 + $0x8] sm:$0xff]
    %v40 = vld [vmem:[%s3 + $0x10] sm:$0xff]
    %v41 = vld [vmem:[%s3 + $0x18] sm:$0xff]
    %v42 = vlaneseq
    %v43 = vshrl.u32 %v42, 7
    %v44 = vsub.s32 0, %v43
    %v45 = vrot.slane %v31, %v44
    %vm46 = vcmask 261120
    %v48 = vsel %vm46, %v36, 0
    %v51 = vsel %vm46, %v37, 0
    %53 = vmatprep.subr.mxu0 0.0
    %54 = vmatpush1.msra.mxu0 %v38
    %55 = vmatprep.subr.mxu0 0.0
    %56 = vmatpush1.msra.mxu0 %v39
    %57 = vmatprep.subr.mxu0 0.0
    %58 = vmatpush1.msra.mxu0 %v40
    %59 = vmatprep.subr.mxu0 0.0
    %60 = vmatpush1.msra.mxu0 %v41
    %61 = vmatprep.subr.mxu0 0.0
    %62 = vmatpush1.msra.mxu0 0.0
    %63 = vmatprep.subr.mxu0 0.0
    %64 = vmatpush1.msra.mxu0 0.0
    %65 = vmatprep.subr.mxu0 0.0
    %66 = vmatpush1.msra.mxu0 0.0
    %67 = vmatprep.subr.mxu0 0.0
    %68 = vmatpush1.msra.mxu0 0.0
    %69 = vmatprep.subr.mxu0 0.0
    %70 = vmatpush1.msra.mxu0 0.0
    %71 = vmatprep.subr.mxu0 0.0
    %72 = vmatpush1.msra.mxu0 0.0
    %73 = vmatprep.subr.mxu0 0.0
    %74 = vmatpush1.msra.mxu0 0.0
    %75 = vmatprep.subr.mxu0 0.0
    %76 = vmatpush1.msra.mxu0 0.0
    %77 = vmatprep.subr.mxu0 0.0
    %78 = vmatpush1.msra.mxu0 0.0
    %79 = vmatprep.subr.mxu0 0.0
    %80 = vmatpush1.msra.mxu0 0.0
    %81 = vmatprep.subr.mxu0 0.0
    %82 = vmatpush1.msra.mxu0 0.0
    %83 = vmatprep.subr.mxu0 0.0
    %84 = vmatpush1.msra.mxu0 0.0
    %85 = vmatprep.subr.mxu0 0.0
    %86 = vmatpush1.msra.mxu0 0.0
    %87 = vmatprep.subr.mxu0 0.0
    %88 = vmatpush1.msra.mxu0 0.0
    %89 = vmatprep.subr.mxu0 0.0
    %90 = vmatpush1.msra.mxu0 0.0
    %91 = vmatprep.subr.mxu0 0.0
    %92 = vmatpush1.msra.mxu0 0.0
    %93 = vmatprep.subr.mxu0 0.0
    %94 = vmatpush1.msra.mxu0 0.0
    %95 = vmatprep.subr.mxu0 0.0
    %96 = vmatpush1.msra.mxu0 0.0
    %97 = vmatprep.subr.mxu0 0.0
    %98 = vmatpush1.msra.mxu0 0.0
    %99 = vmatprep.subr.mxu0 0.0
    %100 = vmatpush1.msra.mxu0 0.0
    %101 = vmatprep.subr.mxu0 0.0
    %102 = vmatpush1.msra.mxu0 0.0
    %103 = vmatprep.subr.mxu0 0.0
    %104 = vmatpush1.msra.mxu0 0.0
    %105 = vmatprep.subr.mxu0 0.0
    %106 = vmatpush1.msra.mxu0 0.0
    %107 = vmatprep.subr.mxu0 0.0
    %108 = vmatpush1.msra.mxu0 0.0
    %109 = vmatprep.subr.mxu0 0.0
    %110 = vmatpush1.msra.mxu0 0.0
    %111 = vmatprep.subr.mxu0 0.0
    %112 = vmatpush1.msra.mxu0 0.0
    %113 = vmatprep.subr.mxu0 0.0
    %114 = vmatpush1.msra.mxu0 0.0
    %115 = vmatprep.subr.mxu0 0.0
    %116 = vmatpush1.msra.mxu0 0.0
    %117 = vmatprep.mubr.f32.mxu0 0.0
    %118 = vmatmul.mubr.f32.gmra.mrb[0].mxu0 %v48
    %v119 = vpop.f32.mrb[0].mxu0
    %v120 = vadd.f32 %v45, %v119
    %v121 = vpop.f32.mrb[0].mxu0
    %122 = vmatprep.mubr.f32.mxu0 0.0
    %123 = vmatmul.mubr.f32.gmra.mrb[0].mxu0 %v51
    %v124 = vpop.f32.mrb[0].mxu0
    %v125 = vadd.f32 %v45, %v124
    %v126 = vpop.f32.mrb[0].mxu0
    %127 = vdwg.mxu0
    %v128 = vld [vmem:[%s4] sm:$0xff]
    %v129 = vld [vmem:[%s4 + $0x8] sm:$0xff]
    %v130 = vld [vmem:[%s4 + $0x10] sm:$0xff]
    %v131 = vld [vmem:[%s4 + $0x18] sm:$0xff]
    %v132 = vlaneseq
    %v133 = vand.u32 %v132, 127
    %vm134 = vcmp.lt.s32.totalorder %v133, 0
    %v135 = vsub.s32 0, %v133
    %v136 = vsel %vm134, %v135, %v133
    %v137 = vshrl.u32 %v136, 5
    %v138 = vand.u32 %v136, 31
    %v139 = vsub.s32 0, %v138
    %v140 = vsel %vm134, %v139, %v138
    %vm141 = vcmp.ne.s32.totalorder %v140, 0
    %vm142 = vcmp.lt.s32.totalorder %v140, 0
    %vm143 = vmand %vm142, %vm141
    %v144 = vadd.s32 %v140, 32
    %v145 = vsel %vm143, %v144, %v140
    %vm146 = vcmp.lt.s32.totalorder %v145, 16
    %vm147 = vcmp.lt.s32.totalorder %v133, 16
    %v148 = vlaneseq
    %v149 = vshrl.u32 %v148, 7
    %vm150 = vcmp.ge.s32.totalorder %v133, 16
    %v151 = vsub.s32 7, %v149
    %v152 = vsel %vm150, %v151, %v149
    %v153 = vsel %vm146, 1, 0
    %vm154 = vcmp.eq.s32.totalorder %v153, 1
    %v156 = vrot.slane %v125, 6
    %v158 = vsel %vm154, %v120, %v156
    %v160 = vsel %vm46, 0.0, 0
    %162 = vmatprep.subr.mxu0 0.0
    %163 = vmatpush1.msra.mxu0 %v128
    %164 = vmatprep.subr.mxu0 0.0
    %165 = vmatpush1.msra.mxu0 %v129
    %166 = vmatprep.subr.mxu0 0.0
    %167 = vmatpush1.msra.mxu0 %v130
    %168 = vmatprep.subr.mxu0 0.0
    %169 = vmatpush1.msra.mxu0 %v131
    %170 = vmatprep.subr.mxu0 0.0
    %171 = vmatpush1.msra.mxu0 0.0
    %172 = vmatprep.subr.mxu0 0.0
    %173 = vmatpush1.msra.mxu0 0.0
    %174 = vmatprep.subr.mxu0 0.0
    %175 = vmatpush1.msra.mxu0 0.0
    %176 = vmatprep.subr.mxu0 0.0
    %177 = vmatpush1.msra.mxu0 0.0
    %178 = vmatprep.subr.mxu0 0.0
    %179 = vmatpush1.msra.mxu0 0.0
    %180 = vmatprep.subr.mxu0 0.0
    %181 = vmatpush1.msra.mxu0 0.0
    %182 = vmatprep.subr.mxu0 0.0
    %183 = vmatpush1.msra.mxu0 0.0
    %184 = vmatprep.subr.mxu0 0.0
    %185 = vmatpush1.msra.mxu0 0.0
    %186 = vmatprep.subr.mxu0 0.0
    %187 = vmatpush1.msra.mxu0 0.0
    %188 = vmatprep.subr.mxu0 0.0
    %189 = vmatpush1.msra.mxu0 0.0
    %190 = vmatprep.subr.mxu0 0.0
    %191 = vmatpush1.msra.mxu0 0.0
    %192 = vmatprep.subr.mxu0 0.0
    %193 = vmatpush1.msra.mxu0 0.0
    %194 = vmatprep.subr.mxu0 0.0
    %195 = vmatpush1.msra.mxu0 0.0
    %196 = vmatprep.subr.mxu0 0.0
    %197 = vmatpush1.msra.mxu0 0.0
    %198 = vmatprep.subr.mxu0 0.0
    %199 = vmatpush1.msra.mxu0 0.0
    %200 = vmatprep.subr.mxu0 0.0
    %201 = vmatpush1.msra.mxu0 0.0
    %202 = vmatprep.subr.mxu0 0.0
    %203 = vmatpush1.msra.mxu0 0.0
    %204 = vmatprep.subr.mxu0 0.0
    %205 = vmatpush1.msra.mxu0 0.0
    %206 = vmatprep.subr.mxu0 0.0
    %207 = vmatpush1.msra.mxu0 0.0
    %208 = vmatprep.subr.mxu0 0.0
    %209 = vmatpush1.msra.mxu0 0.0
    %210 = vmatprep.subr.mxu0 0.0
    %211 = vmatpush1.msra.mxu0 0.0
    %212 = vmatprep.subr.mxu0 0.0
    %213 = vmatpush1.msra.mxu0 0.0
    %214 = vmatprep.subr.mxu0 0.0
    %215 = vmatpush1.msra.mxu0 0.0
    %216 = vmatprep.subr.mxu0 0.0
    %217 = vmatpush1.msra.mxu0 0.0
    %218 = vmatprep.subr.mxu0 0.0
    %219 = vmatpush1.msra.mxu0 0.0
    %220 = vmatprep.subr.mxu0 0.0
    %221 = vmatpush1.msra.mxu0 0.0
    %222 = vmatprep.subr.mxu0 0.0
    %223 = vmatpush1.msra.mxu0 0.0
    %224 = vmatprep.subr.mxu0 0.0
    %225 = vmatpush1.msra.mxu0 0.0
    %226 = vmatprep.mubr.f32.mxu0 0.0
    %227 = vmatmul.mubr.f32.gmra.mrb[0].mxu0 %v160
    %v228 = vpop.f32.mrb[0].mxu0
    %v229 = vadd.f32 0.0, %v228
    %v230 = vpop.f32.mrb[0].mxu0
    %231 = vdwg.mxu0
    %v232 = vadd.f32 %v158, %v229
    %v233 = vxor.u32 %v232, 2147483648
    %v234 = vmul.f32 %v233, 1.442695
    %v235 = vpow.pop %v234
    %v236 = vadd.f32 %v235, 1.0
    %v237 = vrcp.pop %v236
    %v238 = vmul.f32 1.0, %v237
    %v239 = vlaneseq
    %v240 = vshrl.u32 %v239, 7
    %v241 = vsub.s32 0, %v240
    %v242 = vrot.slane %v32, %v241
    %244 = vrot.lane.b32.xlu0 %v242, 64
    %v245 = vpop.permute.xlu0 %244
    %v247 = vadd.f32 %v229, %v245
    %249 = vrot.lane.b32.xlu0 %v247, 64
    %v250 = vpop.permute.xlu0 %249
    %v252 = vmul.f32 %v238, %v250
    %254 = vrot.lane.b32.xlu0 %v252, 64
    %v255 = vpop.permute.xlu0 %254
    %v257 = vadd.f32 %v158, %v255
    %v258 = vtanh.pop %v257
    %v259 = vsub.f32 1.0, %v238
    %261 = vrot.lane.b32.xlu0 %v258, 96
    %v262 = vpop.permute.xlu0 %261
    %v264 = vmul.f32 %v259, %v262
    %v265 = vmul.f32 %v238, 0.0
    %v266 = vadd.f32 %v264, %v265
    %267 = vset.pattern.permute.xlu0 0
    %268 = vperm.xlu0 %267, %v30
    %v269 = vpop.permute.xlu0 %268
    %v270 = vlaneseq
    %v271 = vshrl.u32 %v270, 7
    %v272 = vsub.s32 0, %v271
    %v273 = vrot.slane %v152, %v272
    %vm274 = vcmp.gt.s32.totalorder %v269, %v273
    %276 = vrot.lane.b32.xlu0 %v266, 96
    %v277 = vpop.permute.xlu0 %276
    %v279 = vsel %vm274, %v277, 0.0
    %v280 = vrot.slane %v125, 2
    %v282 = vsel %vm154, %v120, %v280
    %v284 = vsel %vm46, %v279, 0
    %286 = vmatprep.subr.mxu0 0.0
    %287 = vmatpush1.msra.mxu0 %v128
    %288 = vmatprep.subr.mxu0 0.0
    %289 = vmatpush1.msra.mxu0 %v129
    %290 = vmatprep.subr.mxu0 0.0
    %291 = vmatpush1.msra.mxu0 %v130
    %292 = vmatprep.subr.mxu0 0.0
    %293 = vmatpush1.msra.mxu0 %v131
    %294 = vmatprep.subr.mxu0 0.0
    %295 = vmatpush1.msra.mxu0 0.0
    %296 = vmatprep.subr.mxu0 0.0
    %297 = vmatpush1.msra.mxu0 0.0
    %298 = vmatprep.subr.mxu0 0.0
    %299 = vmatpush1.msra.mxu0 0.0
    %300 = vmatprep.subr.mxu0 0.0
    %301 = vmatpush1.msra.mxu0 0.0
    %302 = vmatprep.subr.mxu0 0.0
    %303 = vmatpush1.msra.mxu0 0.0
    %304 = vmatprep.subr.mxu0 0.0
    %305 = vmatpush1.msra.mxu0 0.0
    %306 = vmatprep.subr.mxu0 0.0
    %307 = vmatpush1.msra.mxu0 0.0
    %308 = vmatprep.subr.mxu0 0.0
    %309 = vmatpush1.msra.mxu0 0.0
    %310 = vmatprep.subr.mxu0 0.0
    %311 = vmatpush1.msra.mxu0 0.0
    %312 = vmatprep.subr.mxu0 0.0
    %313 = vmatpush1.msra.mxu0 0.0
    %314 = vmatprep.subr.mxu0 0.0
    %315 = vmatpush1.msra.mxu0 0.0
    %316 = vmatprep.subr.mxu0 0.0
    %317 = vmatpush1.msra.mxu0 0.0
    %318 = vmatprep.subr.mxu0 0.0
    %319 = vmatpush1.msra.mxu0 0.0
    %320 = vmatprep.subr.mxu0 0.0
    %321 = vmatpush1.msra.mxu0 0.0
    %322 = vmatprep.subr.mxu0 0.0
    %323 = vmatpush1.msra.mxu0 0.0
    %324 = vmatprep.subr.mxu0 0.0
    %325 = vmatpush1.msra.mxu0 0.0
    %326 = vmatprep.subr.mxu0 0.0
    %327 = vmatpush1.msra.mxu0 0.0
    %328 = vmatprep.subr.mxu0 0.0
    %329 = vmatpush1.msra.mxu0 0.0
    %330 = vmatprep.subr.mxu0 0.0
    %331 = vmatpush1.msra.mxu0 0.0
    %332 = vmatprep.subr.mxu0 0.0
    %333 = vmatpush1.msra.mxu0 0.0
    %334 = vmatprep.subr.mxu0 0.0
    %335 = vmatpush1.msra.mxu0 0.0
    %336 = vmatprep.subr.mxu0 0.0
    %337 = vmatpush1.msra.mxu0 0.0
    %338 = vmatprep.subr.mxu0 0.0
    %339 = vmatpush1.msra.mxu0 0.0
    %340 = vmatprep.subr.mxu0 0.0
    %341 = vmatpush1.msra.mxu0 0.0
    %342 = vmatprep.subr.mxu0 0.0
    %343 = vmatpush1.msra.mxu0 0.0
    %344 = vmatprep.subr.mxu0 0.0
    %345 = vmatpush1.msra.mxu0 0.0
    %346 = vmatprep.subr.mxu0 0.0
    %347 = vmatpush1.msra.mxu0 0.0
    %348 = vmatprep.subr.mxu0 0.0
    %349 = vmatpush1.msra.mxu0 0.0
    %350 = vmatprep.mubr.f32.mxu0 0.0
    %351 = vmatmul.mubr.f32.gmra.mrb[0].mxu0 %v284
    %v352 = vpop.f32.mrb[0].mxu0
    %v353 = vadd.f32 0.0, %v352
    %v354 = vpop.f32.mrb[0].mxu0
    %355 = vdwg.mxu0
    %v357 = vrot.slane %v353, 6
    %v359 = vadd.f32 %v282, %v357
    %v360 = vxor.u32 %v359, 2147483648
    %v361 = vmul.f32 %v360, 1.442695
    %v362 = vpow.pop %v361
    %v363 = vadd.f32 %v362, 1.0
    %v364 = vrcp.pop %v363
    %v365 = vmul.f32 1.0, %v364
    %v366 = vadd.f32 %v353, %v245
    %v368 = vrot.slane %v366, 6
    %369 = vrot.lane.b32.xlu0 %v368, 64
    %v370 = vpop.permute.xlu0 %369
    %v372 = vmul.f32 %v365, %v370
    %374 = vrot.lane.b32.xlu0 %v372, 64
    %v375 = vpop.permute.xlu0 %374
    %v377 = vadd.f32 %v282, %v375
    %v378 = vtanh.pop %v377
    %v379 = vsub.f32 1.0, %v365
    %381 = vrot.lane.b32.xlu0 %v378, 96
    %v382 = vpop.permute.xlu0 %381
    %v384 = vmul.f32 %v379, %v382
    %v385 = vrot.slane %v279, 6
    %386 = vrot.lane.b32.xlu0 %v385, 32
    %v387 = vpop.permute.xlu0 %386
    %v389 = vmul.f32 %v365, %v387
    %v390 = vadd.f32 %v384, %v389
    %v391 = vlaneseq
    %v392 = vshrl.u32 %v391, 7
    %v393 = vsub.s32 1, %v392
    %v394 = vrot.slane %v152, %v393
    %vm395 = vcmp.gt.s32.totalorder %v269, %v394
    %v397 = vrot.slane %v390, 2
    %398 = vrot.lane.b32.xlu0 %v397, 96
    %v399 = vpop.permute.xlu0 %398
    %v401 = vsel %vm395, %v399, %v279
    %v402 = vsel %vm395, %v399, 0.0
    %v404 = vsel %vm46, %v401, 0
    %406 = vmatprep.subr.mxu0 0.0
    %407 = vmatpush1.msra.mxu0 %v128
    %408 = vmatprep.subr.mxu0 0.0
    %409 = vmatpush1.msra.mxu0 %v129
    %410 = vmatprep.subr.mxu0 0.0
    %411 = vmatpush1.msra.mxu0 %v130
    %412 = vmatprep.subr.mxu0 0.0
    %413 = vmatpush1.msra.mxu0 %v131
    %414 = vmatprep.subr.mxu0 0.0
    %415 = vmatpush1.msra.mxu0 0.0
    %416 = vmatprep.subr.mxu0 0.0
    %417 = vmatpush1.msra.mxu0 0.0
    %418 = vmatprep.subr.mxu0 0.0
    %419 = vmatpush1.msra.mxu0 0.0
    %420 = vmatprep.subr.mxu0 0.0
    %421 = vmatpush1.msra.mxu0 0.0
    %422 = vmatprep.subr.mxu0 0.0
    %423 = vmatpush1.msra.mxu0 0.0
    %424 = vmatprep.subr.mxu0 0.0
    %425 = vmatpush1.msra.mxu0 0.0
    %426 = vmatprep.subr.mxu0 0.0
    %427 = vmatpush1.msra.mxu0 0.0
    %428 = vmatprep.subr.mxu0 0.0
    %429 = vmatpush1.msra.mxu0 0.0
    %430 = vmatprep.subr.mxu0 0.0
    %431 = vmatpush1.msra.mxu0 0.0
    %432 = vmatprep.subr.mxu0 0.0
    %433 = vmatpush1.msra.mxu0 0.0
    %434 = vmatprep.subr.mxu0 0.0
    %435 = vmatpush1.msra.mxu0 0.0
    %436 = vmatprep.subr.mxu0 0.0
    %437 = vmatpush1.msra.mxu0 0.0
    %438 = vmatprep.subr.mxu0 0.0
    %439 = vmatpush1.msra.mxu0 0.0
    %440 = vmatprep.subr.mxu0 0.0
    %441 = vmatpush1.msra.mxu0 0.0
    %442 = vmatprep.subr.mxu0 0.0
    %443 = vmatpush1.msra.mxu0 0.0
    %444 = vmatprep.subr.mxu0 0.0
    %445 = vmatpush1.msra.mxu0 0.0
    %446 = vmatprep.subr.mxu0 0.0
    %447 = vmatpush1.msra.mxu0 0.0
    %448 = vmatprep.subr.mxu0 0.0
    %449 = vmatpush1.msra.mxu0 0.0
    %450 = vmatprep.subr.mxu0 0.0
    %451 = vmatpush1.msra.mxu0 0.0
    %452 = vmatprep.subr.mxu0 0.0
    %453 = vmatpush1.msra.mxu0 0.0
    %454 = vmatprep.subr.mxu0 0.0
    %455 = vmatpush1.msra.mxu0 0.0
    %456 = vmatprep.subr.mxu0 0.0
    %457 = vmatpush1.msra.mxu0 0.0
    %458 = vmatprep.subr.mxu0 0.0
    %459 = vmatpush1.msra.mxu0 0.0
    %460 = vmatprep.subr.mxu0 0.0
    %461 = vmatpush1.msra.mxu0 0.0
    %462 = vmatprep.subr.mxu0 0.0
    %463 = vmatpush1.msra.mxu0 0.0
    %464 = vmatprep.subr.mxu0 0.0
    %465 = vmatpush1.msra.mxu0 0.0
    %466 = vmatprep.subr.mxu0 0.0
    %467 = vmatpush1.msra.mxu0 0.0
    %468 = vmatprep.subr.mxu0 0.0
    %469 = vmatpush1.msra.mxu0 0.0
    %470 = vmatprep.mubr.f32.mxu0 0.0
    %471 = vmatmul.mubr.f32.gmra.mrb[0].mxu0 %v404
    %v472 = vpop.f32.mrb[0].mxu0
    %v473 = vadd.f32 0.0, %v472
    %v474 = vpop.f32.mrb[0].mxu0
    %475 = vdwg.mxu0
    %v477 = vrot.slane %v473, 4
    %v479 = vadd.f32 %v158, %v477
    %v480 = vxor.u32 %v479, 2147483648
    %v481 = vmul.f32 %v480, 1.442695
    %v482 = vpow.pop %v481
    %v483 = vadd.f32 %v482, 1.0
    %v484 = vrcp.pop %v483
    %v485 = vmul.f32 1.0, %v484
    %v486 = vadd.f32 %v473, %v245
    %v488 = vrot.slane %v486, 4
    %489 = vrot.lane.b32.xlu0 %v488, 64
    %v490 = vpop.permute.xlu0 %489
    %v492 = vmul.f32 %v485, %v490
    %494 = vrot.lane.b32.xlu0 %v492, 64
    %v495 = vpop.permute.xlu0 %494
    %v497 = vadd.f32 %v158, %v495
    %v498 = vtanh.pop %v497
    %v499 = vsub.f32 1.0, %v485
    %501 = vrot.lane.b32.xlu0 %v498, 96
    %v502 = vpop.permute.xlu0 %501
    %v504 = vmul.f32 %v499, %v502
    %v505 = vrot.slane %v401, 4
    %506 = vrot.lane.b32.xlu0 %v505, 32
    %v507 = vpop.permute.xlu0 %506
    %v509 = vmul.f32 %v485, %v507
    %v510 = vadd.f32 %v504, %v509
    %v511 = vlaneseq
    %v512 = vshrl.u32 %v511, 7
    %v513 = vsub.s32 2, %v512
    %v514 = vrot.slane %v152, %v513
    %vm515 = vcmp.gt.s32.totalorder %v269, %v514
    %v517 = vrot.slane %v510, 4
    %518 = vrot.lane.b32.xlu0 %v517, 96
    %v519 = vpop.permute.xlu0 %518
    %v521 = vsel %vm515, %v519, %v401
    %v522 = vsel %vm515, %v519, 0.0
    %v524 = vsel %vm46, %v521, 0
    %526 = vmatprep.subr.mxu0 0.0
    %527 = vmatpush1.msra.mxu0 %v128
    %528 = vmatprep.subr.mxu0 0.0
    %529 = vmatpush1.msra.mxu0 %v129
    %530 = vmatprep.subr.mxu0 0.0
    %531 = vmatpush1.msra.mxu0 %v130
    %532 = vmatprep.subr.mxu0 0.0
    %533 = vmatpush1.msra.mxu0 %v131
    %534 = vmatprep.subr.mxu0 0.0
    %535 = vmatpush1.msra.mxu0 0.0
    %536 = vmatprep.subr.mxu0 0.0
    %537 = vmatpush1.msra.mxu0 0.0
    %538 = vmatprep.subr.mxu0 0.0
    %539 = vmatpush1.msra.mxu0 0.0
    %540 = vmatprep.subr.mxu0 0.0
    %541 = vmatpush1.msra.mxu0 0.0
    %542 = vmatprep.subr.mxu0 0.0
    %543 = vmatpush1.msra.mxu0 0.0
    %544 = vmatprep.subr.mxu0 0.0
    %545 = vmatpush1.msra.mxu0 0.0
    %546 = vmatprep.subr.mxu0 0.0
    %547 = vmatpush1.msra.mxu0 0.0
    %548 = vmatprep.subr.mxu0 0.0
    %549 = vmatpush1.msra.mxu0 0.0
    %550 = vmatprep.subr.mxu0 0.0
    %551 = vmatpush1.msra.mxu0 0.0
    %552 = vmatprep.subr.mxu0 0.0
    %553 = vmatpush1.msra.mxu0 0.0
    %554 = vmatprep.subr.mxu0 0.0
    %555 = vmatpush1.msra.mxu0 0.0
    %556 = vmatprep.subr.mxu0 0.0
    %557 = vmatpush1.msra.mxu0 0.0
    %558 = vmatprep.subr.mxu0 0.0
    %559 = vmatpush1.msra.mxu0 0.0
    %560 = vmatprep.subr.mxu0 0.0
    %561 = vmatpush1.msra.mxu0 0.0
    %562 = vmatprep.subr.mxu0 0.0
    %563 = vmatpush1.msra.mxu0 0.0
    %564 = vmatprep.subr.mxu0 0.0
    %565 = vmatpush1.msra.mxu0 0.0
    %566 = vmatprep.subr.mxu0 0.0
    %567 = vmatpush1.msra.mxu0 0.0
    %568 = vmatprep.subr.mxu0 0.0
    %569 = vmatpush1.msra.mxu0 0.0
    %570 = vmatprep.subr.mxu0 0.0
    %571 = vmatpush1.msra.mxu0 0.0
    %572 = vmatprep.subr.mxu0 0.0
    %573 = vmatpush1.msra.mxu0 0.0
    %574 = vmatprep.subr.mxu0 0.0
    %575 = vmatpush1.msra.mxu0 0.0
    %576 = vmatprep.subr.mxu0 0.0
    %577 = vmatpush1.msra.mxu0 0.0
    %578 = vmatprep.subr.mxu0 0.0
    %579 = vmatpush1.msra.mxu0 0.0
    %580 = vmatprep.subr.mxu0 0.0
    %581 = vmatpush1.msra.mxu0 0.0
    %582 = vmatprep.subr.mxu0 0.0
    %583 = vmatpush1.msra.mxu0 0.0
    %584 = vmatprep.subr.mxu0 0.0
    %585 = vmatpush1.msra.mxu0 0.0
    %586 = vmatprep.subr.mxu0 0.0
    %587 = vmatpush1.msra.mxu0 0.0
    %588 = vmatprep.subr.mxu0 0.0
    %589 = vmatpush1.msra.mxu0 0.0
    %590 = vmatprep.mubr.f32.mxu0 0.0
    %591 = vmatmul.mubr.f32.gmra.mrb[0].mxu0 %v524
    %v592 = vpop.f32.mrb[0].mxu0
    %v593 = vadd.f32 0.0, %v592
    %v594 = vpop.f32.mrb[0].mxu0
    %595 = vdwg.mxu0
    %v597 = vrot.slane %v593, 2
    %v599 = vadd.f32 %v282, %v597
    %v600 = vxor.u32 %v599, 2147483648
    %v601 = vmul.f32 %v600, 1.442695
    %v602 = vpow.pop %v601
    %v603 = vadd.f32 %v602, 1.0
    %v604 = vrcp.pop %v603
    %v605 = vmul.f32 1.0, %v604
    %v606 = vadd.f32 %v593, %v245
    %v608 = vrot.slane %v606, 2
    %609 = vrot.lane.b32.xlu0 %v608, 64
    %v610 = vpop.permute.xlu0 %609
    %v612 = vmul.f32 %v605, %v610
    %614 = vrot.lane.b32.xlu0 %v612, 64
    %v615 = vpop.permute.xlu0 %614
    %v617 = vadd.f32 %v282, %v615
    %v618 = vtanh.pop %v617
    %v619 = vsub.f32 1.0, %v605
    %621 = vrot.lane.b32.xlu0 %v618, 96
    %v622 = vpop.permute.xlu0 %621
    %v624 = vmul.f32 %v619, %v622
    %v625 = vrot.slane %v521, 2
    %626 = vrot.lane.b32.xlu0 %v625, 32
    %v627 = vpop.permute.xlu0 %626
    %v629 = vmul.f32 %v605, %v627
    %v630 = vadd.f32 %v624, %v629
    %v631 = vlaneseq
    %v632 = vshrl.u32 %v631, 7
    %v633 = vsub.s32 3, %v632
    %v634 = vrot.slane %v152, %v633
    %vm635 = vcmp.gt.s32.totalorder %v269, %v634
    %v637 = vrot.slane %v630, 6
    %638 = vrot.lane.b32.xlu0 %v637, 96
    %v639 = vpop.permute.xlu0 %638
    %v641 = vsel %vm635, %v639, %v521
    %v642 = vsel %vm635, %v639, 0.0
    %v644 = vrot.slane %v120, 6
    %v646 = vsel %vm154, %v125, %v644
    %v648 = vsel %vm46, %v641, 0
    %650 = vmatprep.subr.mxu0 0.0
    %651 = vmatpush1.msra.mxu0 %v128
    %652 = vmatprep.subr.mxu0 0.0
    %653 = vmatpush1.msra.mxu0 %v129
    %654 = vmatprep.subr.mxu0 0.0
    %655 = vmatpush1.msra.mxu0 %v130
    %656 = vmatprep.subr.mxu0 0.0
    %657 = vmatpush1.msra.mxu0 %v131
    %658 = vmatprep.subr.mxu0 0.0
    %659 = vmatpush1.msra.mxu0 0.0
    %660 = vmatprep.subr.mxu0 0.0
    %661 = vmatpush1.msra.mxu0 0.0
    %662 = vmatprep.subr.mxu0 0.0
    %663 = vmatpush1.msra.mxu0 0.0
    %664 = vmatprep.subr.mxu0 0.0
    %665 = vmatpush1.msra.mxu0 0.0
    %666 = vmatprep.subr.mxu0 0.0
    %667 = vmatpush1.msra.mxu0 0.0
    %668 = vmatprep.subr.mxu0 0.0
    %669 = vmatpush1.msra.mxu0 0.0
    %670 = vmatprep.subr.mxu0 0.0
    %671 = vmatpush1.msra.mxu0 0.0
    %672 = vmatprep.subr.mxu0 0.0
    %673 = vmatpush1.msra.mxu0 0.0
    %674 = vmatprep.subr.mxu0 0.0
    %675 = vmatpush1.msra.mxu0 0.0
    %676 = vmatprep.subr.mxu0 0.0
    %677 = vmatpush1.msra.mxu0 0.0
    %678 = vmatprep.subr.mxu0 0.0
    %679 = vmatpush1.msra.mxu0 0.0
    %680 = vmatprep.subr.mxu0 0.0
    %681 = vmatpush1.msra.mxu0 0.0
    %682 = vmatprep.subr.mxu0 0.0
    %683 = vmatpush1.msra.mxu0 0.0
    %684 = vmatprep.subr.mxu0 0.0
    %685 = vmatpush1.msra.mxu0 0.0
    %686 = vmatprep.subr.mxu0 0.0
    %687 = vmatpush1.msra.mxu0 0.0
    %688 = vmatprep.subr.mxu0 0.0
    %689 = vmatpush1.msra.mxu0 0.0
    %690 = vmatprep.subr.mxu0 0.0
    %691 = vmatpush1.msra.mxu0 0.0
    %692 = vmatprep.subr.mxu0 0.0
    %693 = vmatpush1.msra.mxu0 0.0
    %694 = vmatprep.subr.mxu0 0.0
    %695 = vmatpush1.msra.mxu0 0.0
    %696 = vmatprep.subr.mxu0 0.0
    %697 = vmatpush1.msra.mxu0 0.0
    %698 = vmatprep.subr.mxu0 0.0
    %699 = vmatpush1.msra.mxu0 0.0
    %700 = vmatprep.subr.mxu0 0.0
    %701 = vmatpush1.msra.mxu0 0.0
    %702 = vmatprep.subr.mxu0 0.0
    %703 = vmatpush1.msra.mxu0 0.0
    %704 = vmatprep.subr.mxu0 0.0
    %705 = vmatpush1.msra.mxu0 0.0
    %706 = vmatprep.subr.mxu0 0.0
    %707 = vmatpush1.msra.mxu0 0.0
    %708 = vmatprep.subr.mxu0 0.0
    %709 = vmatpush1.msra.mxu0 0.0
    %710 = vmatprep.subr.mxu0 0.0
    %711 = vmatpush1.msra.mxu0 0.0
    %712 = vmatprep.subr.mxu0 0.0
    %713 = vmatpush1.msra.mxu0 0.0
    %714 = vmatprep.mubr.f32.mxu0 0.0
    %715 = vmatmul.mubr.f32.gmra.mrb[0].mxu0 %v648
    %v716 = vpop.f32.mrb[0].mxu0
    %v717 = vadd.f32 0.0, %v716
    %v718 = vpop.f32.mrb[0].mxu0
    %719 = vdwg.mxu0
    %v720 = vadd.f32 %v646, %v717
    %v721 = vxor.u32 %v720, 2147483648
    %v722 = vmul.f32 %v721, 1.442695
    %v723 = vpow.pop %v722
    %v724 = vadd.f32 %v723, 1.0
    %v725 = vrcp.pop %v724
    %v726 = vmul.f32 1.0, %v725
    %v727 = vadd.f32 %v717, %v245
    %729 = vrot.lane.b32.xlu0 %v727, 64
    %v730 = vpop.permute.xlu0 %729
    %v732 = vmul.f32 %v726, %v730
    %734 = vrot.lane.b32.xlu0 %v732, 64
    %v735 = vpop.permute.xlu0 %734
    %v737 = vadd.f32 %v646, %v735
    %v738 = vtanh.pop %v737
    %v739 = vsub.f32 1.0, %v726
    %741 = vrot.lane.b32.xlu0 %v738, 96
    %v742 = vpop.permute.xlu0 %741
    %v744 = vmul.f32 %v739, %v742
    %745 = vrot.lane.b32.xlu0 %v641, 32
    %v746 = vpop.permute.xlu0 %745
    %v748 = vmul.f32 %v726, %v746
    %v749 = vadd.f32 %v744, %v748
    %v750 = vlaneseq
    %v751 = vshrl.u32 %v750, 7
    %v752 = vsub.s32 4, %v751
    %v753 = vrot.slane %v152, %v752
    %vm754 = vcmp.gt.s32.totalorder %v269, %v753
    %756 = vrot.lane.b32.xlu0 %v749, 96
    %v757 = vpop.permute.xlu0 %756
    %v759 = vsel %vm754, %v757, %v641
    %v760 = vsel %vm754, %v757, 0.0
    %v761 = vrot.slane %v120, 2
    %v763 = vsel %vm154, %v125, %v761
    %v765 = vsel %vm46, %v759, 0
    %767 = vmatprep.subr.mxu0 0.0
    %768 = vmatpush1.msra.mxu0 %v128
    %769 = vmatprep.subr.mxu0 0.0
    %770 = vmatpush1.msra.mxu0 %v129
    %771 = vmatprep.subr.mxu0 0.0
    %772 = vmatpush1.msra.mxu0 %v130
    %773 = vmatprep.subr.mxu0 0.0
    %774 = vmatpush1.msra.mxu0 %v131
    %775 = vmatprep.subr.mxu0 0.0
    %776 = vmatpush1.msra.mxu0 0.0
    %777 = vmatprep.subr.mxu0 0.0
    %778 = vmatpush1.msra.mxu0 0.0
    %779 = vmatprep.subr.mxu0 0.0
    %780 = vmatpush1.msra.mxu0 0.0
    %781 = vmatprep.subr.mxu0 0.0
    %782 = vmatpush1.msra.mxu0 0.0
    %783 = vmatprep.subr.mxu0 0.0
    %784 = vmatpush1.msra.mxu0 0.0
    %785 = vmatprep.subr.mxu0 0.0
    %786 = vmatpush1.msra.mxu0 0.0
    %787 = vmatprep.subr.mxu0 0.0
    %788 = vmatpush1.msra.mxu0 0.0
    %789 = vmatprep.subr.mxu0 0.0
    %790 = vmatpush1.msra.mxu0 0.0
    %791 = vmatprep.subr.mxu0 0.0
    %792 = vmatpush1.msra.mxu0 0.0
    %793 = vmatprep.subr.mxu0 0.0
    %794 = vmatpush1.msra.mxu0 0.0
    %795 = vmatprep.subr.mxu0 0.0
    %796 = vmatpush1.msra.mxu0 0.0
    %797 = vmatprep.subr.mxu0 0.0
    %798 = vmatpush1.msra.mxu0 0.0
    %799 = vmatprep.subr.mxu0 0.0
    %800 = vmatpush1.msra.mxu0 0.0
    %801 = vmatprep.subr.mxu0 0.0
    %802 = vmatpush1.msra.mxu0 0.0
    %803 = vmatprep.subr.mxu0 0.0
    %804 = vmatpush1.msra.mxu0 0.0
    %805 = vmatprep.subr.mxu0 0.0
    %806 = vmatpush1.msra.mxu0 0.0
    %807 = vmatprep.subr.mxu0 0.0
    %808 = vmatpush1.msra.mxu0 0.0
    %809 = vmatprep.subr.mxu0 0.0
    %810 = vmatpush1.msra.mxu0 0.0
    %811 = vmatprep.subr.mxu0 0.0
    %812 = vmatpush1.msra.mxu0 0.0
    %813 = vmatprep.subr.mxu0 0.0
    %814 = vmatpush1.msra.mxu0 0.0
    %815 = vmatprep.subr.mxu0 0.0
    %816 = vmatpush1.msra.mxu0 0.0
    %817 = vmatprep.subr.mxu0 0.0
    %818 = vmatpush1.msra.mxu0 0.0
    %819 = vmatprep.subr.mxu0 0.0
    %820 = vmatpush1.msra.mxu0 0.0
    %821 = vmatprep.subr.mxu0 0.0
    %822 = vmatpush1.msra.mxu0 0.0
    %823 = vmatprep.subr.mxu0 0.0
    %824 = vmatpush1.msra.mxu0 0.0
    %825 = vmatprep.subr.mxu0 0.0
    %826 = vmatpush1.msra.mxu0 0.0
    %827 = vmatprep.subr.mxu0 0.0
    %828 = vmatpush1.msra.mxu0 0.0
    %829 = vmatprep.subr.mxu0 0.0
    %830 = vmatpush1.msra.mxu0 0.0
    %831 = vmatprep.mubr.f32.mxu0 0.0
    %832 = vmatmul.mubr.f32.gmra.mrb[0].mxu0 %v765
    %v833 = vpop.f32.mrb[0].mxu0
    %v834 = vadd.f32 0.0, %v833
    %v835 = vpop.f32.mrb[0].mxu0
    %836 = vdwg.mxu0
    %v838 = vrot.slane %v834, 6
    %v840 = vadd.f32 %v763, %v838
    %v841 = vxor.u32 %v840, 2147483648
    %v842 = vmul.f32 %v841, 1.442695
    %v843 = vpow.pop %v842
    %v844 = vadd.f32 %v843, 1.0
    %v845 = vrcp.pop %v844
    %v846 = vmul.f32 1.0, %v845
    %v847 = vadd.f32 %v834, %v245
    %v849 = vrot.slane %v847, 6
    %850 = vrot.lane.b32.xlu0 %v849, 64
    %v851 = vpop.permute.xlu0 %850
    %v853 = vmul.f32 %v846, %v851
    %855 = vrot.lane.b32.xlu0 %v853, 64
    %v856 = vpop.permute.xlu0 %855
    %v858 = vadd.f32 %v763, %v856
    %v859 = vtanh.pop %v858
    %v860 = vsub.f32 1.0, %v846
    %862 = vrot.lane.b32.xlu0 %v859, 96
    %v863 = vpop.permute.xlu0 %862
    %v865 = vmul.f32 %v860, %v863
    %v866 = vrot.slane %v759, 6
    %867 = vrot.lane.b32.xlu0 %v866, 32
    %v868 = vpop.permute.xlu0 %867
    %v870 = vmul.f32 %v846, %v868
    %v871 = vadd.f32 %v865, %v870
    %v872 = vlaneseq
    %v873 = vshrl.u32 %v872, 7
    %v874 = vsub.s32 5, %v873
    %v875 = vrot.slane %v152, %v874
    %vm876 = vcmp.gt.s32.totalorder %v269, %v875
    %v878 = vrot.slane %v871, 2
    %879 = vrot.lane.b32.xlu0 %v878, 96
    %v880 = vpop.permute.xlu0 %879
    %v882 = vsel %vm876, %v880, %v759
    %v883 = vsel %vm876, %v880, 0.0
    %v885 = vsel %vm46, %v882, 0
    %887 = vmatprep.subr.mxu0 0.0
    %888 = vmatpush1.msra.mxu0 %v128
    %889 = vmatprep.subr.mxu0 0.0
    %890 = vmatpush1.msra.mxu0 %v129
    %891 = vmatprep.subr.mxu0 0.0
    %892 = vmatpush1.msra.mxu0 %v130
    %893 = vmatprep.subr.mxu0 0.0
    %894 = vmatpush1.msra.mxu0 %v131
    %895 = vmatprep.subr.mxu0 0.0
    %896 = vmatpush1.msra.mxu0 0.0
    %897 = vmatprep.subr.mxu0 0.0
    %898 = vmatpush1.msra.mxu0 0.0
    %899 = vmatprep.subr.mxu0 0.0
    %900 = vmatpush1.msra.mxu0 0.0
    %901 = vmatprep.subr.mxu0 0.0
    %902 = vmatpush1.msra.mxu0 0.0
    %903 = vmatprep.subr.mxu0 0.0
    %904 = vmatpush1.msra.mxu0 0.0
    %905 = vmatprep.subr.mxu0 0.0
    %906 = vmatpush1.msra.mxu0 0.0
    %907 = vmatprep.subr.mxu0 0.0
    %908 = vmatpush1.msra.mxu0 0.0
    %909 = vmatprep.subr.mxu0 0.0
    %910 = vmatpush1.msra.mxu0 0.0
    %911 = vmatprep.subr.mxu0 0.0
    %912 = vmatpush1.msra.mxu0 0.0
    %913 = vmatprep.subr.mxu0 0.0
    %914 = vmatpush1.msra.mxu0 0.0
    %915 = vmatprep.subr.mxu0 0.0
    %916 = vmatpush1.msra.mxu0 0.0
    %917 = vmatprep.subr.mxu0 0.0
    %918 = vmatpush1.msra.mxu0 0.0
    %919 = vmatprep.subr.mxu0 0.0
    %920 = vmatpush1.msra.mxu0 0.0
    %921 = vmatprep.subr.mxu0 0.0
    %922 = vmatpush1.msra.mxu0 0.0
    %923 = vmatprep.subr.mxu0 0.0
    %924 = vmatpush1.msra.mxu0 0.0
    %925 = vmatprep.subr.mxu0 0.0
    %926 = vmatpush1.msra.mxu0 0.0
    %927 = vmatprep.subr.mxu0 0.0
    %928 = vmatpush1.msra.mxu0 0.0
    %929 = vmatprep.subr.mxu0 0.0
    %930 = vmatpush1.msra.mxu0 0.0
    %931 = vmatprep.subr.mxu0 0.0
    %932 = vmatpush1.msra.mxu0 0.0
    %933 = vmatprep.subr.mxu0 0.0
    %934 = vmatpush1.msra.mxu0 0.0
    %935 = vmatprep.subr.mxu0 0.0
    %936 = vmatpush1.msra.mxu0 0.0
    %937 = vmatprep.subr.mxu0 0.0
    %938 = vmatpush1.msra.mxu0 0.0
    %939 = vmatprep.subr.mxu0 0.0
    %940 = vmatpush1.msra.mxu0 0.0
    %941 = vmatprep.subr.mxu0 0.0
    %942 = vmatpush1.msra.mxu0 0.0
    %943 = vmatprep.subr.mxu0 0.0
    %944 = vmatpush1.msra.mxu0 0.0
    %945 = vmatprep.subr.mxu0 0.0
    %946 = vmatpush1.msra.mxu0 0.0
    %947 = vmatprep.subr.mxu0 0.0
    %948 = vmatpush1.msra.mxu0 0.0
    %949 = vmatprep.subr.mxu0 0.0
    %950 = vmatpush1.msra.mxu0 0.0
    %951 = vmatprep.mubr.f32.mxu0 0.0
    %952 = vmatmul.mubr.f32.gmra.mrb[0].mxu0 %v885
    %v953 = vpop.f32.mrb[0].mxu0
    %v954 = vadd.f32 0.0, %v953
    %v955 = vpop.f32.mrb[0].mxu0
    %956 = vdwg.mxu0
    %v958 = vrot.slane %v954, 4
    %v960 = vadd.f32 %v646, %v958
    %v961 = vxor.u32 %v960, 2147483648
    %v962 = vmul.f32 %v961, 1.442695
    %v963 = vpow.pop %v962
    %v964 = vadd.f32 %v963, 1.0
    %v965 = vrcp.pop %v964
    %v966 = vmul.f32 1.0, %v965
    %v967 = vadd.f32 %v954, %v245
    %v969 = vrot.slane %v967, 4
    %970 = vrot.lane.b32.xlu0 %v969, 64
    %v971 = vpop.permute.xlu0 %970
    %v973 = vmul.f32 %v966, %v971
    %975 = vrot.lane.b32.xlu0 %v973, 64
    %v976 = vpop.permute.xlu0 %975
    %v978 = vadd.f32 %v646, %v976
    %v979 = vtanh.pop %v978
    %v980 = vsub.f32 1.0, %v966
    %982 = vrot.lane.b32.xlu0 %v979, 96
    %v983 = vpop.permute.xlu0 %982
    %v985 = vmul.f32 %v980, %v983
    %v986 = vrot.slane %v882, 4
    %987 = vrot.lane.b32.xlu0 %v986, 32
    %v988 = vpop.permute.xlu0 %987
    %v990 = vmul.f32 %v966, %v988
    %v991 = vadd.f32 %v985, %v990
    %v992 = vlaneseq
    %v993 = vshrl.u32 %v992, 7
    %v994 = vsub.s32 6, %v993
    %v995 = vrot.slane %v152, %v994
    %vm996 = vcmp.gt.s32.totalorder %v269, %v995
    %v998 = vrot.slane %v991, 4
    %999 = vrot.lane.b32.xlu0 %v998, 96
    %v1000 = vpop.permute.xlu0 %999
    %v1002 = vsel %vm996, %v1000, %v882
    %v1003 = vsel %vm996, %v1000, 0.0
    %v1005 = vsel %vm46, %v1002, 0
    %1007 = vmatprep.subr.mxu0 0.0
    %1008 = vmatpush1.msra.mxu0 %v128
    %1009 = vmatprep.subr.mxu0 0.0
    %1010 = vmatpush1.msra.mxu0 %v129
    %1011 = vmatprep.subr.mxu0 0.0
    %1012 = vmatpush1.msra.mxu0 %v130
    %1013 = vmatprep.subr.mxu0 0.0
    %1014 = vmatpush1.msra.mxu0 %v131
    %1015 = vmatprep.subr.mxu0 0.0
    %1016 = vmatpush1.msra.mxu0 0.0
    %1017 = vmatprep.subr.mxu0 0.0
    %1018 = vmatpush1.msra.mxu0 0.0
    %1019 = vmatprep.subr.mxu0 0.0
    %1020 = vmatpush1.msra.mxu0 0.0
    %1021 = vmatprep.subr.mxu0 0.0
    %1022 = vmatpush1.msra.mxu0 0.0
    %1023 = vmatprep.subr.mxu0 0.0
    %1024 = vmatpush1.msra.mxu0 0.0
    %1025 = vmatprep.subr.mxu0 0.0
    %1026 = vmatpush1.msra.mxu0 0.0
    %1027 = vmatprep.subr.mxu0 0.0
    %1028 = vmatpush1.msra.mxu0 0.0
    %1029 = vmatprep.subr.mxu0 0.0
    %1030 = vmatpush1.msra.mxu0 0.0
    %1031 = vmatprep.subr.mxu0 0.0
    %1032 = vmatpush1.msra.mxu0 0.0
    %1033 = vmatprep.subr.mxu0 0.0
    %1034 = vmatpush1.msra.mxu0 0.0
    %1035 = vmatprep.subr.mxu0 0.0
    %1036 = vmatpush1.msra.mxu0 0.0
    %1037 = vmatprep.subr.mxu0 0.0
    %1038 = vmatpush1.msra.mxu0 0.0
    %1039 = vmatprep.subr.mxu0 0.0
    %1040 = vmatpush1.msra.mxu0 0.0
    %1041 = vmatprep.subr.mxu0 0.0
    %1042 = vmatpush1.msra.mxu0 0.0
    %1043 = vmatprep.subr.mxu0 0.0
    %1044 = vmatpush1.msra.mxu0 0.0
    %1045 = vmatprep.subr.mxu0 0.0
    %1046 = vmatpush1.msra.mxu0 0.0
    %1047 = vmatprep.subr.mxu0 0.0
    %1048 = vmatpush1.msra.mxu0 0.0
    %1049 = vmatprep.subr.mxu0 0.0
    %1050 = vmatpush1.msra.mxu0 0.0
    %1051 = vmatprep.subr.mxu0 0.0
    %1052 = vmatpush1.msra.mxu0 0.0
    %1053 = vmatprep.subr.mxu0 0.0
    %1054 = vmatpush1.msra.mxu0 0.0
    %1055 = vmatprep.subr.mxu0 0.0
    %1056 = vmatpush1.msra.mxu0 0.0
    %1057 = vmatprep.subr.mxu0 0.0
    %1058 = vmatpush1.msra.mxu0 0.0
    %1059 = vmatprep.subr.mxu0 0.0
    %1060 = vmatpush1.msra.mxu0 0.0
    %1061 = vmatprep.subr.mxu0 0.0
    %1062 = vmatpush1.msra.mxu0 0.0
    %1063 = vmatprep.subr.mxu0 0.0
    %1064 = vmatpush1.msra.mxu0 0.0
    %1065 = vmatprep.subr.mxu0 0.0
    %1066 = vmatpush1.msra.mxu0 0.0
    %1067 = vmatprep.subr.mxu0 0.0
    %1068 = vmatpush1.msra.mxu0 0.0
    %1069 = vmatprep.subr.mxu0 0.0
    %1070 = vmatpush1.msra.mxu0 0.0
    %1071 = vmatprep.mubr.f32.mxu0 0.0
    %1072 = vmatmul.mubr.f32.gmra.mrb[0].mxu0 %v1005
    %v1073 = vpop.f32.mrb[0].mxu0
    %v1074 = vadd.f32 0.0, %v1073
    %v1075 = vpop.f32.mrb[0].mxu0
    %1076 = vdwg.mxu0
    %v1078 = vrot.slane %v1074, 2
    %v1080 = vadd.f32 %v763, %v1078
    %v1081 = vxor.u32 %v1080, 2147483648
    %v1082 = vmul.f32 %v1081, 1.442695
    %v1083 = vpow.pop %v1082
    %v1084 = vadd.f32 %v1083, 1.0
    %v1085 = vrcp.pop %v1084
    %v1086 = vmul.f32 1.0, %v1085
    %v1087 = vadd.f32 %v1074, %v245
    %v1089 = vrot.slane %v1087, 2
    %1090 = vrot.lane.b32.xlu0 %v1089, 64
    %v1091 = vpop.permute.xlu0 %1090
    %v1093 = vmul.f32 %v1086, %v1091
    %1095 = vrot.lane.b32.xlu0 %v1093, 64
    %v1096 = vpop.permute.xlu0 %1095
    %v1098 = vadd.f32 %v763, %v1096
    %v1099 = vtanh.pop %v1098
    %v1100 = vsub.f32 1.0, %v1086
    %1102 = vrot.lane.b32.xlu0 %v1099, 96
    %v1103 = vpop.permute.xlu0 %1102
    %v1105 = vmul.f32 %v1100, %v1103
    %v1106 = vrot.slane %v1002, 2
    %1107 = vrot.lane.b32.xlu0 %v1106, 32
    %v1108 = vpop.permute.xlu0 %1107
    %v1110 = vmul.f32 %v1086, %v1108
    %v1111 = vadd.f32 %v1105, %v1110
    %v1112 = vlaneseq
    %v1113 = vshrl.u32 %v1112, 7
    %v1114 = vsub.s32 7, %v1113
    %v1115 = vrot.slane %v152, %v1114
    %vm1116 = vcmp.gt.s32.totalorder %v269, %v1115
    %v1118 = vrot.slane %v1111, 6
    %1119 = vrot.lane.b32.xlu0 %v1118, 96
    %v1120 = vpop.permute.xlu0 %1119
    %v1122 = vsel %vm1116, %v1120, %v1002
    %v1123 = vsel %vm1116, %v1120, 0.0
    %v1124 = vsel %vm147, 1, 0
    %vm1125 = vcmp.eq.s32.totalorder %v1124, 1
    %v1126 = vsel %vm1125, %v279, %v1123
    %v1127 = vsel %vm1125, %v402, %v1003
    %v1128 = vsel %vm1125, %v522, %v883
    %v1129 = vsel %vm1125, %v642, %v760
    %v1130 = vsel %vm1125, %v760, %v642
    %v1131 = vsel %vm1125, %v883, %v522
    %v1132 = vsel %vm1125, %v1003, %v402
    %v1133 = vsel %vm1125, %v1123, %v279
    %v1134 = vlaneseq
    %v1135 = vshrl.u32 %v1134, 7
    %v1136 = vsub.s32 0, %v1135
    %v1137 = vrot.slane %v33, %v1136
    %1142 = vrot.lane.b32.xlu0 %v128, 32
    %v1143 = vpop.permute.xlu0 %1142
    %1144 = vrot.lane.b32.xlu0 %v129, 32
    %v1145 = vpop.permute.xlu0 %1144
    %1146 = vrot.lane.b32.xlu0 %v130, 32
    %v1147 = vpop.permute.xlu0 %1146
    %1148 = vrot.lane.b32.xlu0 %v131, 32
    %v1149 = vpop.permute.xlu0 %1148
    %v1155 = vsel %vm46, %v1122, 0
    %1157 = vmatprep.subr.mxu0 0.0
    %1158 = vmatpush1.msra.mxu0 %v1143
    %1159 = vmatprep.subr.mxu0 0.0
    %1160 = vmatpush1.msra.mxu0 %v1145
    %1161 = vmatprep.subr.mxu0 0.0
    %1162 = vmatpush1.msra.mxu0 %v1147
    %1163 = vmatprep.subr.mxu0 0.0
    %1164 = vmatpush1.msra.mxu0 %v1149
    %1165 = vmatprep.subr.mxu0 0.0
    %1166 = vmatpush1.msra.mxu0 0.0
    %1167 = vmatprep.subr.mxu0 0.0
    %1168 = vmatpush1.msra.mxu0 0.0
    %1169 = vmatprep.subr.mxu0 0.0
    %1170 = vmatpush1.msra.mxu0 0.0
    %1171 = vmatprep.subr.mxu0 0.0
    %1172 = vmatpush1.msra.mxu0 0.0
    %1173 = vmatprep.subr.mxu0 0.0
    %1174 = vmatpush1.msra.mxu0 0.0
    %1175 = vmatprep.subr.mxu0 0.0
    %1176 = vmatpush1.msra.mxu0 0.0
    %1177 = vmatprep.subr.mxu0 0.0
    %1178 = vmatpush1.msra.mxu0 0.0
    %1179 = vmatprep.subr.mxu0 0.0
    %1180 = vmatpush1.msra.mxu0 0.0
    %1181 = vmatprep.subr.mxu0 0.0
    %1182 = vmatpush1.msra.mxu0 0.0
    %1183 = vmatprep.subr.mxu0 0.0
    %1184 = vmatpush1.msra.mxu0 0.0
    %1185 = vmatprep.subr.mxu0 0.0
    %1186 = vmatpush1.msra.mxu0 0.0
    %1187 = vmatprep.subr.mxu0 0.0
    %1188 = vmatpush1.msra.mxu0 0.0
    %1189 = vmatprep.subr.mxu0 0.0
    %1190 = vmatpush1.msra.mxu0 0.0
    %1191 = vmatprep.subr.mxu0 0.0
    %1192 = vmatpush1.msra.mxu0 0.0
    %1193 = vmatprep.subr.mxu0 0.0
    %1194 = vmatpush1.msra.mxu0 0.0
    %1195 = vmatprep.subr.mxu0 0.0
    %1196 = vmatpush1.msra.mxu0 0.0
    %1197 = vmatprep.subr.mxu0 0.0
    %1198 = vmatpush1.msra.mxu0 0.0
    %1199 = vmatprep.subr.mxu0 0.0
    %1200 = vmatpush1.msra.mxu0 0.0
    %1201 = vmatprep.subr.mxu0 0.0
    %1202 = vmatpush1.msra.mxu0 0.0
    %1203 = vmatprep.subr.mxu0 0.0
    %1204 = vmatpush1.msra.mxu0 0.0
    %1205 = vmatprep.subr.mxu0 0.0
    %1206 = vmatpush1.msra.mxu0 0.0
    %1207 = vmatprep.subr.mxu0 0.0
    %1208 = vmatpush1.msra.mxu0 0.0
    %1209 = vmatprep.subr.mxu0 0.0
    %1210 = vmatpush1.msra.mxu0 0.0
    %1211 = vmatprep.subr.mxu0 0.0
    %1212 = vmatpush1.msra.mxu0 0.0
    %1213 = vmatprep.subr.mxu0 0.0
    %1214 = vmatpush1.msra.mxu0 0.0
    %1215 = vmatprep.subr.mxu0 0.0
    %1216 = vmatpush1.msra.mxu0 0.0
    %1217 = vmatprep.subr.mxu0 0.0
    %1218 = vmatpush1.msra.mxu0 0.0
    %1219 = vmatprep.subr.mxu0 0.0
    %1220 = vmatpush1.msra.mxu0 0.0
    %1221 = vmatprep.mubr.f32.mxu0 0.0
    %1222 = vmatmul.mubr.f32.gmra.mrb[0].mxu0 %v1155
    %v1223 = vpop.f32.mrb[0].mxu0
    %v1224 = vadd.f32 %v1137, %v1223
    %v1225 = vpop.f32.mrb[0].mxu0
    %1226 = vdwg.mxu0
    %v1227 = vadd.f32 %v1126, %v1224
    %v1228 = vtanh.pop %v1227
    %v1229 = vadd.f32 %v1127, %v1224
    %v1230 = vtanh.pop %v1229
    %v1231 = vadd.f32 %v1128, %v1224
    %v1232 = vtanh.pop %v1231
    %v1233 = vadd.f32 %v1129, %v1224
    %v1234 = vtanh.pop %v1233
    %v1235 = vadd.f32 %v1130, %v1224
    %v1236 = vtanh.pop %v1235
    %v1237 = vadd.f32 %v1131, %v1224
    %v1238 = vtanh.pop %v1237
    %v1239 = vadd.f32 %v1132, %v1224
    %v1240 = vtanh.pop %v1239
    %v1241 = vadd.f32 %v1133, %v1224
    %v1242 = vtanh.pop %v1241
    %1244 = vrot.lane.b32.xlu0 %v1230, 32
    %v1245 = vpop.permute.xlu0 %1244
    %1248 = vrot.lane.b32.xlu0 %v1232, 64
    %v1249 = vpop.permute.xlu0 %1248
    %1252 = vrot.lane.b32.xlu0 %v1234, 96
    %v1253 = vpop.permute.xlu0 %1252
    %1256 = vrot.lane.b32.xlu0 %v1238, 32
    %v1257 = vpop.permute.xlu0 %1256
    %1260 = vrot.lane.b32.xlu0 %v1240, 64
    %v1261 = vpop.permute.xlu0 %1260
    %1264 = vrot.lane.b32.xlu0 %v1242, 96
    %v1265 = vpop.permute.xlu0 %1264
    %v1267 = vsel %vm46, %v1228, %v1245
    %vm1268 = vcmask 523264
    %v1269 = vsel %vm1268, %v1267, %v1249
    %vm1270 = vcmask 785408
    %v1271 = vsel %vm1270, %v1269, %v1253
    %v1272 = vsel %vm46, %v1236, %v1257
    %v1273 = vsel %vm1268, %v1272, %v1261
    %v1274 = vsel %vm1270, %v1273, %v1265
    %v1275 = vld [vmem:[%s5] sm:$0xff]
    %v1276 = vld [vmem:[%s5 + $0x8] sm:$0xff]
    %v1277 = vld [vmem:[%s5 + $0x10] sm:$0xff]
    %v1278 = vld [vmem:[%s5 + $0x18] sm:$0xff]
    %v1279 = vld [vmem:[%s5 + $0x20] sm:$0xff]
    %v1280 = vld [vmem:[%s5 + $0x28] sm:$0xff]
    %v1281 = vld [vmem:[%s5 + $0x30] sm:$0xff]
    %v1282 = vld [vmem:[%s5 + $0x38] sm:$0xff]
    %v1283 = vld [vmem:[%s5 + $0x40] sm:$0xff]
    %v1284 = vld [vmem:[%s5 + $0x48] sm:$0xff]
    %v1285 = vld [vmem:[%s5 + $0x50] sm:$0xff]
    %v1286 = vld [vmem:[%s5 + $0x58] sm:$0xff]
    %v1287 = vld [vmem:[%s5 + $0x60] sm:$0xff]
    %v1288 = vld [vmem:[%s5 + $0x68] sm:$0xff]
    %v1289 = vld [vmem:[%s5 + $0x70] sm:$0xff]
    %v1290 = vld [vmem:[%s5 + $0x78] sm:$0xff]
    %v1291 = vld [vmem:[%s5 + $0x80] sm:$0xff]
    %v1292 = vld [vmem:[%s5 + $0x88] sm:$0xff]
    %v1293 = vld [vmem:[%s5 + $0x90] sm:$0xff]
    %v1294 = vld [vmem:[%s5 + $0x98] sm:$0xff]
    %v1295 = vld [vmem:[%s5 + $0xa0] sm:$0xff]
    %v1296 = vld [vmem:[%s5 + $0xa8] sm:$0xff]
    %v1297 = vld [vmem:[%s5 + $0xb0] sm:$0xff]
    %v1298 = vld [vmem:[%s5 + $0xb8] sm:$0xff]
    %v1299 = vld [vmem:[%s5 + $0xc0] sm:$0xff]
    %v1300 = vld [vmem:[%s5 + $0xc8] sm:$0xff]
    %v1301 = vld [vmem:[%s5 + $0xd0] sm:$0xff]
    %v1302 = vld [vmem:[%s5 + $0xd8] sm:$0xff]
    %v1303 = vld [vmem:[%s5 + $0xe0] sm:$0xff]
    %v1304 = vld [vmem:[%s5 + $0xe8] sm:$0xff]
    %v1305 = vld [vmem:[%s5 + $0xf0] sm:$0xff]
    %v1306 = vld [vmem:[%s5 + $0xf8] sm:$0xff]
    %s1308 = vtos %v34
    %v1309 = vstv %s1308
    %1311 = vmatprep.subr.mxu0 0.0
    %1312 = vmatpush1.msra.mxu0 %v1275
    %1313 = vmatprep.subr.mxu0 0.0
    %1314 = vmatpush1.msra.mxu0 %v1276
    %1315 = vmatprep.subr.mxu0 0.0
    %1316 = vmatpush1.msra.mxu0 %v1277
    %1317 = vmatprep.subr.mxu0 0.0
    %1318 = vmatpush1.msra.mxu0 %v1278
    %1319 = vmatprep.subr.mxu0 0.0
    %1320 = vmatpush1.msra.mxu0 %v1279
    %1321 = vmatprep.subr.mxu0 0.0
    %1322 = vmatpush1.msra.mxu0 %v1280
    %1323 = vmatprep.subr.mxu0 0.0
    %1324 = vmatpush1.msra.mxu0 %v1281
    %1325 = vmatprep.subr.mxu0 0.0
    %1326 = vmatpush1.msra.mxu0 %v1282
    %1327 = vmatprep.subr.mxu0 0.0
    %1328 = vmatpush1.msra.mxu0 %v1283
    %1329 = vmatprep.subr.mxu0 0.0
    %1330 = vmatpush1.msra.mxu0 %v1284
    %1331 = vmatprep.subr.mxu0 0.0
    %1332 = vmatpush1.msra.mxu0 %v1285
    %1333 = vmatprep.subr.mxu0 0.0
    %1334 = vmatpush1.msra.mxu0 %v1286
    %1335 = vmatprep.subr.mxu0 0.0
    %1336 = vmatpush1.msra.mxu0 %v1287
    %1337 = vmatprep.subr.mxu0 0.0
    %1338 = vmatpush1.msra.mxu0 %v1288
    %1339 = vmatprep.subr.mxu0 0.0
    %1340 = vmatpush1.msra.mxu0 %v1289
    %1341 = vmatprep.subr.mxu0 0.0
    %1342 = vmatpush1.msra.mxu0 %v1290
    %1343 = vmatprep.subr.mxu0 0.0
    %1344 = vmatpush1.msra.mxu0 %v1291
    %1345 = vmatprep.subr.mxu0 0.0
    %1346 = vmatpush1.msra.mxu0 %v1292
    %1347 = vmatprep.subr.mxu0 0.0
    %1348 = vmatpush1.msra.mxu0 %v1293
    %1349 = vmatprep.subr.mxu0 0.0
    %1350 = vmatpush1.msra.mxu0 %v1294
    %1351 = vmatprep.subr.mxu0 0.0
    %1352 = vmatpush1.msra.mxu0 %v1295
    %1353 = vmatprep.subr.mxu0 0.0
    %1354 = vmatpush1.msra.mxu0 %v1296
    %1355 = vmatprep.subr.mxu0 0.0
    %1356 = vmatpush1.msra.mxu0 %v1297
    %1357 = vmatprep.subr.mxu0 0.0
    %1358 = vmatpush1.msra.mxu0 %v1298
    %1359 = vmatprep.subr.mxu0 0.0
    %1360 = vmatpush1.msra.mxu0 %v1299
    %1361 = vmatprep.subr.mxu0 0.0
    %1362 = vmatpush1.msra.mxu0 %v1300
    %1363 = vmatprep.subr.mxu0 0.0
    %1364 = vmatpush1.msra.mxu0 %v1301
    %1365 = vmatprep.subr.mxu0 0.0
    %1366 = vmatpush1.msra.mxu0 %v1302
    %1367 = vmatprep.subr.mxu0 0.0
    %1368 = vmatpush1.msra.mxu0 %v1303
    %1369 = vmatprep.subr.mxu0 0.0
    %1370 = vmatpush1.msra.mxu0 %v1304
    %1371 = vmatprep.subr.mxu0 0.0
    %1372 = vmatpush1.msra.mxu0 %v1305
    %1373 = vmatprep.subr.mxu0 0.0
    %1374 = vmatpush1.msra.mxu0 %v1306
    %1375 = vmatprep.mubr.f32.mxu0 %v1274
    %1376 = vmatmul.mubr.f32.gmra.mrb[0].mxu0 %v1271
    %v1377 = vpop.f32.mrb[0].mxu0
    %v1378 = vadd.f32 %v1309, %v1377
    %v1379 = vpop.f32.mrb[0].mxu0
    %1380 = vdwg.mxu0
    %vm1381 = vcmask 58368
    %v1382 = vsel %vm1381, %v1378, -inf
    %1383 = vmax.xlane.f32.xlu0 %v1382
    %v1384 = vpop.xlane.xlu0 %1383
    %v1385 = vsub.f32 %v1378, %v1384
    %v1386 = vmul.f32 %v1385, 1.442695
    %v1387 = vpow.pop %v1386
    %v1388 = vsel %vm1381, %v1387, 0.0
    %1389 = vadd.xlane.f32.xlu0 %v1388
    %v1390 = vpop.xlane.xlu0 %1389
    %v1391 = vrcp.pop %v1390
    %v1392 = vmul.f32 %v1387, %v1391
    %1394 = vset.pattern.permute.xlu0 0
    %1395 = vperm.xlu0 %1394, %v1392
    %v1396 = vpop.permute.xlu0 %1395
    %v1398 = vmul.f32 %v1396, %v1126
    %1399 = vset.pattern.permute.xlu0 1
    %1400 = vperm.xlu0 %1399, %v1392
    %v1401 = vpop.permute.xlu0 %1400
    %v1403 = vmul.f32 %v1401, %v1127
    %v1404 = vadd.f32 %v1398, %v1403
    %1405 = vset.pattern.permute.xlu0 2
    %1406 = vperm.xlu0 %1405, %v1392
    %v1407 = vpop.permute.xlu0 %1406
    %v1409 = vmul.f32 %v1407, %v1128
    %v1410 = vadd.f32 %v1404, %v1409
    %1411 = vset.pattern.permute.xlu0 3
    %1412 = vperm.xlu0 %1411, %v1392
    %v1413 = vpop.permute.xlu0 %1412
    %v1415 = vmul.f32 %v1413, %v1129
    %v1416 = vadd.f32 %v1410, %v1415
    %1417 = vset.pattern.permute.xlu0 4
    %1418 = vperm.xlu0 %1417, %v1392
    %v1419 = vpop.permute.xlu0 %1418
    %v1421 = vmul.f32 %v1419, %v1130
    %v1422 = vadd.f32 %v1416, %v1421
    %1423 = vset.pattern.permute.xlu0 5
    %1424 = vperm.xlu0 %1423, %v1392
    %v1425 = vpop.permute.xlu0 %1424
    %v1427 = vmul.f32 %v1425, %v1131
    %v1428 = vadd.f32 %v1422, %v1427
    %1429 = vset.pattern.permute.xlu0 6
    %1430 = vperm.xlu0 %1429, %v1392
    %v1431 = vpop.permute.xlu0 %1430
    %v1433 = vmul.f32 %v1431, %v1132
    %v1434 = vadd.f32 %v1428, %v1433
    %1435 = vset.pattern.permute.xlu0 7
    %1436 = vperm.xlu0 %1435, %v1392
    %v1437 = vpop.permute.xlu0 %1436
    %v1439 = vmul.f32 %v1437, %v1133
    %v1440 = vadd.f32 %v1434, %v1439
    %v1441 = vld [vmem:[%s2] sm:$0x3]
    %1443 = vrot.lane.b32.xlu0 %v1441, 32
    %v1444 = vpop.permute.xlu0 %1443
    %v1446 = vsel %vm46, %v1440, %v1444
    %v1447 = vld [vmem:[%s6] sm:$0xff]
    %v1448 = vld [vmem:[%s6 + $0x8] sm:$0xff]
    %v1449 = vld [vmem:[%s6 + $0x10] sm:$0xff]
    %v1450 = vld [vmem:[%s6 + $0x18] sm:$0xff]
    %v1451 = vld [vmem:[%s6 + $0x20] sm:$0xff]
    %v1452 = vld [vmem:[%s6 + $0x28] sm:$0xff]
    %v1453 = vlaneseq
    %v1454 = vshrl.u32 %v1453, 7
    %v1455 = vsub.s32 0, %v1454
    %v1456 = vrot.slane %v35, %v1455
    %vm1457 = vcmask 392192
    %v1459 = vsel %vm1457, %v1446, 0
    %1461 = vmatprep.subr.mxu0 0.0
    %1462 = vmatpush1.msra.mxu0 %v1447
    %1463 = vmatprep.subr.mxu0 0.0
    %1464 = vmatpush1.msra.mxu0 %v1448
    %1465 = vmatprep.subr.mxu0 0.0
    %1466 = vmatpush1.msra.mxu0 %v1449
    %1467 = vmatprep.subr.mxu0 0.0
    %1468 = vmatpush1.msra.mxu0 %v1450
    %1469 = vmatprep.subr.mxu0 0.0
    %1470 = vmatpush1.msra.mxu0 %v1451
    %1471 = vmatprep.subr.mxu0 0.0
    %1472 = vmatpush1.msra.mxu0 %v1452
    %1473 = vmatprep.subr.mxu0 0.0
    %1474 = vmatpush1.msra.mxu0 0.0
    %1475 = vmatprep.subr.mxu0 0.0
    %1476 = vmatpush1.msra.mxu0 0.0
    %1477 = vmatprep.subr.mxu0 0.0
    %1478 = vmatpush1.msra.mxu0 0.0
    %1479 = vmatprep.subr.mxu0 0.0
    %1480 = vmatpush1.msra.mxu0 0.0
    %1481 = vmatprep.subr.mxu0 0.0
    %1482 = vmatpush1.msra.mxu0 0.0
    %1483 = vmatprep.subr.mxu0 0.0
    %1484 = vmatpush1.msra.mxu0 0.0
    %1485 = vmatprep.subr.mxu0 0.0
    %1486 = vmatpush1.msra.mxu0 0.0
    %1487 = vmatprep.subr.mxu0 0.0
    %1488 = vmatpush1.msra.mxu0 0.0
    %1489 = vmatprep.subr.mxu0 0.0
    %1490 = vmatpush1.msra.mxu0 0.0
    %1491 = vmatprep.subr.mxu0 0.0
    %1492 = vmatpush1.msra.mxu0 0.0
    %1493 = vmatprep.subr.mxu0 0.0
    %1494 = vmatpush1.msra.mxu0 0.0
    %1495 = vmatprep.subr.mxu0 0.0
    %1496 = vmatpush1.msra.mxu0 0.0
    %1497 = vmatprep.subr.mxu0 0.0
    %1498 = vmatpush1.msra.mxu0 0.0
    %1499 = vmatprep.subr.mxu0 0.0
    %1500 = vmatpush1.msra.mxu0 0.0
    %1501 = vmatprep.subr.mxu0 0.0
    %1502 = vmatpush1.msra.mxu0 0.0
    %1503 = vmatprep.subr.mxu0 0.0
    %1504 = vmatpush1.msra.mxu0 0.0
    %1505 = vmatprep.subr.mxu0 0.0
    %1506 = vmatpush1.msra.mxu0 0.0
    %1507 = vmatprep.subr.mxu0 0.0
    %1508 = vmatpush1.msra.mxu0 0.0
    %1509 = vmatprep.subr.mxu0 0.0
    %1510 = vmatpush1.msra.mxu0 0.0
    %1511 = vmatprep.subr.mxu0 0.0
    %1512 = vmatpush1.msra.mxu0 0.0
    %1513 = vmatprep.subr.mxu0 0.0
    %1514 = vmatpush1.msra.mxu0 0.0
    %1515 = vmatprep.subr.mxu0 0.0
    %1516 = vmatpush1.msra.mxu0 0.0
    %1517 = vmatprep.subr.mxu0 0.0
    %1518 = vmatpush1.msra.mxu0 0.0
    %1519 = vmatprep.subr.mxu0 0.0
    %1520 = vmatpush1.msra.mxu0 0.0
    %1521 = vmatprep.subr.mxu0 0.0
    %1522 = vmatpush1.msra.mxu0 0.0
    %1523 = vmatprep.subr.mxu0 0.0
    %1524 = vmatpush1.msra.mxu0 0.0
    %1525 = vmatprep.mubr.f32.mxu0 0.0
    %1526 = vmatmul.mubr.f32.gmra.mrb[0].mxu0 %v1459
    %v1527 = vpop.f32.mrb[0].mxu0
    %v1528 = vadd.f32 %v1456, %v1527
    %v1529 = vpop.f32.mrb[0].mxu0
    %1530 = vdwg.mxu0
    %vm1531 = vcmask 25600
    %1532 = vst.msk [vmem:[#allocation2] sm:$0x3] %vm1531, %v1528
    // Predicated region
    $region34: #{tpu_custom_call.1} parent=1 // pred_check
      _
    $region35: #{tpu_custom_call.1} parent=1 // pred_check_branch
      %1534 = sbr.rel (0) target = $region37
    $region36: #{tpu_custom_call.1} parent=1 // pred_region
      %s1536 = ssub.s32 32, 32
      %1537 = vsyncadd [#allocation3], %s1536
      %s1539 = sshll.u32 [#allocation2], 4
      %s1540 = int_to_ptr.vmem [resolvable:$true] %s1539
      %1542 = dma.vmem_to_hbm [thread:$0]  %s1540, 32, %s8, [#allocation3]
    $region37: #{tpu_custom_call.1} parent=1 // pred_fallthru
      _
    // Predicated region
    $region38: #{tpu_custom_call.1} parent=1 // pred_check
      _
    $region39: #{tpu_custom_call.1} parent=1 // pred_check_branch
      %1544 = sbr.rel (0) target = $region41
    $region40: #{tpu_custom_call.1} parent=1 // pred_region
      %1545 = dma.done [#allocation3], 32
    $region41: #{tpu_custom_call.1} parent=1 // pred_fallthru
      _
    %1546 = vsyncpa [#allocation3], 1

</llo_original>
